<compile_context>
chip_gen: v7x
topology: tpu7x:2x2x1
jax: 0.10.0
libtpu: 0.0.40
codegen_flags: <defaults>
</compile_context>

<pallas_src>
import jax
import jax.numpy as jnp
from jax.experimental import pallas as pl
from jax.experimental.pallas import tpu as pltpu


# ---------------------------------------------------------------------------
# Parameter init (synthetic, deterministic — the real net loads a checkpoint,
# which is not reproducible in-script).
# ---------------------------------------------------------------------------
def init_pointcn_raw(key, cin, cout, attention):
    keys = jax.random.split(key, 19)

    def vec(k, c, center):
        return center + 0.1 * jax.random.normal(k, (c,), dtype=jnp.float32)

    def mat(k, co, ci):
        return 0.3 * jax.random.normal(k, (co, ci), dtype=jnp.float32)

    p = dict(
        cin=cin, cout=cout,
        in1_g=vec(keys[0], cin, 1.0), in1_b=vec(keys[1], cin, 0.0),
        bn1_g=vec(keys[2], cin, 1.0), bn1_b=vec(keys[3], cin, 0.0),
        w1=mat(keys[4], cout, cin),
        in2_g=vec(keys[5], cout, 1.0), in2_b=vec(keys[6], cout, 0.0),
        bn2_g=vec(keys[7], cout, 1.0), bn2_b=vec(keys[8], cout, 0.0),
        w2=mat(keys[9], cout, cout),
        in3_g=vec(keys[10], cout, 1.0), in3_b=vec(keys[11], cout, 0.0),
        bn3_g=vec(keys[12], cout, 1.0), bn3_b=vec(keys[13], cout, 0.0),
        w3=mat(keys[14], cout, cout),
        wsc=None, bsc=None, att_w=None, att_b=None,
    )
    if cin != cout:                                   # shortcut Conv1d (has bias)
        p['wsc'] = mat(keys[15], cout, cin)
        p['bsc'] = vec(keys[16], cout, 0.0)
    if attention:                                     # att = Conv1d(cout, 1, bias=True)
        p['att_w'] = vec(keys[17], cout, 0.0)
        p['att_b'] = 0.1 * jax.random.normal(keys[18], (), dtype=jnp.float32)
    return p


def init_encoding_block(key, channels, attention):
    blocks = []
    for i in range(1, len(channels)):
        key, sub = jax.random.split(key)
        blocks.append(init_pointcn_raw(sub, channels[i - 1], channels[i], attention))
    return blocks


# ---------------------------------------------------------------------------
# Parameter packing: one vector bank, one matrix stack, SMEM scalars.
# ---------------------------------------------------------------------------
def pack_encoding_block(blocks, attention):
    cmax = max([blocks[0]['cin']] + [b['cout'] for b in blocks])
    cmax = max(8, ((cmax + 7) // 8) * 8)              # sublane-aligned

    vec_cols, mat_slabs, att_rows, att_bs, descs = [], [], [], [], []

    def add_vec(v):
        vec_cols.append(jnp.pad(v.astype(jnp.float32), (0, cmax - v.shape[0])))
        return len(vec_cols) - 1

    def add_mat(m):
        co, ci = m.shape
        mat_slabs.append(jnp.pad(m.astype(jnp.float32),
                                 ((0, cmax - co), (0, cmax - ci))))
        return len(mat_slabs) - 1

    for p in blocks:
        d = dict(
            in1=(add_vec(p['in1_g']), add_vec(p['in1_b'])),
            bn1=(add_vec(p['bn1_g']), add_vec(p['bn1_b'])),
            w1=add_mat(p['w1']),
            in2=(add_vec(p['in2_g']), add_vec(p['in2_b'])),
            bn2=(add_vec(p['bn2_g']), add_vec(p['bn2_b'])),
            w2=add_mat(p['w2']),
            in3=(add_vec(p['in3_g']), add_vec(p['in3_b'])),
            bn3=(add_vec(p['bn3_g']), add_vec(p['bn3_b'])),
            w3=add_mat(p['w3']),
            has_shortcut=p['wsc'] is not None,
        )
        if d['has_shortcut']:
            d['wsc'] = add_mat(p['wsc'])
            d['bsc'] = add_vec(p['bsc'])
        if attention:
            d['att'] = len(att_rows)
            att_rows.append(jnp.pad(p['att_w'].astype(jnp.float32),
                                    (0, cmax - p['att_w'].shape[0])))
            att_bs.append(jnp.asarray(p['att_b'], jnp.float32))
        descs.append(d)

    vecs = jnp.stack(vec_cols, axis=1)                         # (cmax, V)
    mats = jnp.stack(mat_slabs, axis=0)                        # (M, cmax, cmax)
    attw = jnp.stack(att_rows, axis=0) if attention else None  # (nblk, cmax)
    attb = jnp.stack(att_bs) if attention else None            # (nblk,)
    return cmax, descs, vecs, mats, attw, attb


# ---------------------------------------------------------------------------
# Fused EncodingBlock kernel: whole chain of PointCN blocks in one pallas_call.
# Activation layout inside the kernel: (cmax, B*N).
# ---------------------------------------------------------------------------
def _make_encoding_block_kernel(descs, cmax, nb, n, attention):
    nf = float(n)
    bn_count = float(nb * n)
    inv_n = 1.0 / nf

    def norm_pair(h, g_in, b_in, g_bn, b_bn, relu):
        # Folded InstanceNorm1d(eps=1e-3, affine) + BatchNorm1d(eps=1e-5, batch
        # stats). Single-pass sums per (channel, sample); BN stats derived from
        # those sums exactly; one FMA pass over the big tensor.
        stats = []
        for bi in range(nb):
            slab = h[:, bi * n:(bi + 1) * n]
            s1 = jnp.sum(slab, axis=1, keepdims=True)          # (cmax, 1)
            s2 = jnp.sum(slab * slab, axis=1, keepdims=True)
            mean = s1 * inv_n
            var = jnp.maximum(s2 * inv_n - mean * mean, 0.0)
            a = g_in * jax.lax.rsqrt(var + 1e-3)
            c = b_in - mean * a                                 # y = h*a + c
            stats.append((a, c, s1, s2))
        sum1, sum2 = None, None
        for a, c, s1, s2 in stats:
            t1 = a * s1 + nf * c
            t2 = a * a * s2 + 2.0 * a * c * s1 + nf * c * c
            sum1 = t1 if sum1 is None else sum1 + t1
            sum2 = t2 if sum2 is None else sum2 + t2
        mean_bn = sum1 / bn_count
        var_bn = jnp.maximum(sum2 / bn_count - mean_bn * mean_bn, 0.0)
        s_bn = g_bn * jax.lax.rsqrt(var_bn + 1e-5)
        t_bn = b_bn - mean_bn * s_bn
        outs = []
        for bi in range(nb):
            a, c, _, _ = stats[bi]
            o = h[:, bi * n:(bi + 1) * n] * (a * s_bn) + (c * s_bn + t_bn)
            if relu:
                o = jnp.maximum(o, 0.0)
            outs.append(o)
        return outs[0] if nb == 1 else jnp.concatenate(outs, axis=1)

    def kernel(*refs):
        if attention:
            x_ref, vecs_ref, mats_ref, attw_ref, attb_ref, out_ref = refs
        else:
            x_ref, vecs_ref, mats_ref, out_ref = refs

        def vcol(i):
            return vecs_ref[:, i:i + 1]                         # (cmax, 1)

        act = x_ref[...]                                        # (cmax, B*N)
        for d in descs:
            x = act
            h = norm_pair(x, vcol(d['in1'][0]), vcol(d['in1'][1]),
                          vcol(d['bn1'][0]), vcol(d['bn1'][1]), relu=True)
            h = jnp.dot(mats_ref[d['w1']], h, preferred_element_type=jnp.float32)
            h = norm_pair(h, vcol(d['in2'][0]), vcol(d['in2'][1]),
                          vcol(d['bn2'][0]), vcol(d['bn2'][1]), relu=True)
            h = jnp.dot(mats_ref[d['w2']], h, preferred_element_type=jnp.float32)
            h = norm_pair(h, vcol(d['in3'][0]), vcol(d['in3'][1]),
                          vcol(d['bn3'][0]), vcol(d['bn3'][1]), relu=False)
            h = jnp.dot(mats_ref[d['w3']], h, preferred_element_type=jnp.float32)
            if d['has_shortcut']:
                h = h + jnp.dot(mats_ref[d['wsc']], x,
                                preferred_element_type=jnp.float32) + vcol(d['bsc'])
            else:
                h = h + x
            if attention:
                r = d['att']
                wa = attw_ref[r:r + 1, :]                        # (1, cmax)
                logit = jnp.dot(wa, h, preferred_element_type=jnp.float32)
                logit = logit + attb_ref[r]
                h = h * jax.nn.sigmoid(logit)
            act = h
        out_ref[...] = act.astype(out_ref.dtype)

    return kernel


def encoding_block_forward(x, blocks, attention):
    """x: (B, Cin, N) f32 -> (B, Cout, N) f32. Whole block chain = one kernel."""
    nb, cin, n = x.shape
    cmax, descs, vecs, mats, attw, attb = pack_encoding_block(blocks, attention)
    cout = blocks[-1]['cout']

    # (B, C, N) -> lane-dense (C, B*N), zero-pad channels to cmax (padded rows
    # stay exactly 0 through every norm / conv / gate — all padded params are 0).
    x2 = jnp.transpose(x, (1, 0, 2)).reshape(cin, nb * n)
    x2 = jnp.pad(x2, ((0, cmax - cin), (0, 0)))

    vmem = pl.BlockSpec(memory_space=pltpu.MemorySpace.VMEM)
    smem = pl.BlockSpec(memory_space=pltpu.MemorySpace.SMEM)
    args, specs = [x2, vecs, mats], [vmem, vmem, vmem]
    if attention:
        args += [attw, attb]
        specs += [vmem, smem]

    kernel = _make_encoding_block_kernel(descs, cmax, nb, n, attention)
    out2 = pl.pallas_call(
        kernel,
        out_shape=jax.ShapeDtypeStruct((cmax, nb * n), jnp.float32),
        in_specs=specs,
        out_specs=vmem,
        compiler_params=pltpu.CompilerParams(vmem_limit_bytes=48 * 1024 * 1024),
    )(*args)
    return out2[:cout].reshape(cout, nb, n).transpose(1, 0, 2)


# ---------------------------------------------------------------------------
# Pure-JAX reference (original sequential math, NCW layout) for validation.
# ---------------------------------------------------------------------------
def _in_ref(h, g, b, eps=1e-3):
    mean = jnp.mean(h, axis=-1, keepdims=True)
    var = jnp.mean((h - mean) ** 2, axis=-1, keepdims=True)
    return (h - mean) * jax.lax.rsqrt(var + eps) * g[None, :, None] + b[None, :, None]


def _bn_ref(h, g, b, eps=1e-5):
    mean = jnp.mean(h, axis=(0, 2), keepdims=True)
    var = jnp.mean((h - mean) ** 2, axis=(0, 2), keepdims=True)
    return (h - mean) * jax.lax.rsqrt(var + eps) * g[None, :, None] + b[None, :, None]


def pointcn_ref(x, p, attention):
    h = _in_ref(x, p['in1_g'], p['in1_b'])
    h = _bn_ref(h, p['bn1_g'], p['bn1_b'])
    h = jnp.maximum(h, 0.0)
    h = jnp.einsum('oc,bcn->bon', p['w1'], h)
    h = _in_ref(h, p['in2_g'], p['in2_b'])
    h = _bn_ref(h, p['bn2_g'], p['bn2_b'])
    h = jnp.maximum(h, 0.0)
    h = jnp.einsum('oc,bcn->bon', p['w2'], h)
    h = _in_ref(h, p['in3_g'], p['in3_b'])
    h = _bn_ref(h, p['bn3_g'], p['bn3_b'])
    h = jnp.einsum('oc,bcn->bon', p['w3'], h)
    if p['wsc'] is not None:
        out = h + jnp.einsum('oc,bcn->bon', p['wsc'], x) + p['bsc'][None, :, None]
    else:
        out = h + x
    if attention:
        logit = jnp.einsum('c,bcn->bn', p['att_w'], out)[:, None, :] + p['att_b']
        out = out * jax.nn.sigmoid(logit)
    return out


def encoding_block_ref(x, blocks, attention):
    out = x
    for p in blocks:
        out = pointcn_ref(out, p, attention)
    return out


# ---------------------------------------------------------------------------
# BipartiteMatchingNet forward (normalize -> unet/vnet -> cat -> enet -> conv).
# ---------------------------------------------------------------------------
def normalize_point2ds(x, w, h):
    size = jnp.array([[float(w)], [float(h)]], dtype=jnp.float32)
    center = size / 2.0
    scale = jnp.max(size) * 1.2
    return (x - center) / scale


def normalize_point3ds(x):
    scale = (jnp.max(x) - jnp.min(x)) * 1.2
    return (x - jnp.mean(x)) / scale


def _bmnet_pipeline(PA, PB, MA, Wimg, Himg, params, block_fn):
    ps0 = normalize_point2ds(PA, Wimg, Himg)[None]        # (1, 2, M)
    ps1 = normalize_point3ds(PB)[None]                    # (1, 3, N)
    u = block_fn(ps0, params['unet'], False)
    v = block_fn(ps1, params['vnet'], False)
    # ConcatenationLayer: gather matched columns, concat along channels.
    e0 = jnp.take(u[0], MA[0], axis=1)
    e1 = jnp.take(v[0], MA[1], axis=1)
    e = jnp.concatenate([e0, e1], axis=0)[None]           # (1, Cu+Cv, K)
    e = block_fn(e, params['enet'], False)
    # Final Conv1d(C, 1, 1, bias=True): tiny (1,C)@(C,K) matmul, plain JAX.
    weights = (params['conv_w'] @ e[0] + params['conv_b'][:, None])[0]
    # TODO(synk): hungarian_pooling (scipy linear_sum_assignment on CPU) has no
    # Pallas/TPU equivalent; only the match weights are returned.
    return weights


def bmnet_forward(PA, PB, MA, Wimg, Himg, params):
    return _bmnet_pipeline(PA, PB, MA, Wimg, Himg, params, encoding_block_forward)


def bmnet_forward_ref(PA, PB, MA, Wimg, Himg, params):
    return _bmnet_pipeline(PA, PB, MA, Wimg, Himg, params, encoding_block_ref)


# ---------------------------------------------------------------------------
if __name__ == "__main__":
    key = jax.random.PRNGKey(0)

    # Small shapes consistent with the module (real model: channels up to 256,
    # thousands of points/matches).
    M2D, N3D, K = 128, 128, 128
    Wimg, Himg = 640.0, 480.0
    channels0 = [2, 8, 16]      # unet
    channels1 = [3, 8, 16]      # vnet
    channels2 = [32, 32, 32]    # enet (input = cat channels = 16 + 16)

    key, kpa, kpb, km0, km1 = jax.random.split(key, 5)
    PA = jax.random.uniform(kpa, (2, M2D), jnp.float32) * jnp.array(
        [[Wimg], [Himg]], jnp.float32)
    PB = jax.random.uniform(kpb, (3, N3D), jnp.float32, minval=-2.0, maxval=2.0)
    MA = jnp.stack([jax.random.randint(km0, (K,), 0, M2D),
                    jax.random.randint(km1, (K,), 0, N3D)], axis=0)

    key, ku, kv, ke, kcw, kcb = jax.random.split(key, 6)
    params = dict(
        unet=init_encoding_block(ku, channels0, attention=False),
        vnet=init_encoding_block(kv, channels1, attention=False),
        enet=init_encoding_block(ke, channels2, attention=False),
        conv_w=0.3 * jax.random.normal(kcw, (1, channels2[-1]), jnp.float32),
        conv_b=0.1 * jax.random.normal(kcb, (1,), jnp.float32),
    )

    weights = jax.block_until_ready(bmnet_forward(PA, PB, MA, Wimg, Himg, params))
    weights_ref = bmnet_forward_ref(PA, PB, MA, Wimg, Himg, params)
    assert weights.shape == (K,), weights.shape
    err = float(jnp.max(jnp.abs(weights - weights_ref)))
    assert jnp.allclose(weights, weights_ref, atol=2e-3, rtol=2e-3), err

    # Also exercise the attention-gated + multi-sample (B=2) PointCN path.
    key, kx, kb = jax.random.split(key, 3)
    xa = jax.random.normal(kx, (2, 4, 128), jnp.float32)
    blocks_a = init_encoding_block(kb, [4, 8, 8], attention=True)
    out_a = jax.block_until_ready(encoding_block_forward(xa, blocks_a, True))
    ref_a = encoding_block_ref(xa, blocks_a, True)
    assert out_a.shape == (2, 8, 128), out_a.shape
    err_a = float(jnp.max(jnp.abs(out_a - ref_a)))
    assert jnp.allclose(out_a, ref_a, atol=2e-3, rtol=2e-3), err_a

    print("KERNEL_OK")
</pallas_src>

<mosaic_0001>
module attributes {stable_mosaic.version = 11 : i64} {
  func.func @kernel(%arg0: memref<16x128xf32, #tpu.memory_space<vmem>>, %arg1: memref<16x26xf32, #tpu.memory_space<vmem>>, %arg2: memref<8x16x16xf32, #tpu.memory_space<vmem>>, %arg3: memref<16x128xf32, #tpu.memory_space<vmem>>) attributes {dimension_semantics = [], scalar_prefetch = 0 : i64, scratch_operands = 0 : i64, tpu.core_type = #tpu.core_type<tc>} {
    %c0 = arith.constant 0 : index
    %c0_0 = arith.constant 0 : index
    %0 = vector.load %arg0[%c0, %c0_0] : memref<16x128xf32, #tpu.memory_space<vmem>>, vector<16x128xf32>
    %c0_1 = arith.constant 0 : index
    %c0_2 = arith.constant 0 : index
    %1 = vector.load %arg1[%c0_1, %c0_2] : memref<16x26xf32, #tpu.memory_space<vmem>>, vector<16x1xf32>
    %c0_3 = arith.constant 0 : index
    %c1 = arith.constant 1 : index
    %2 = vector.load %arg1[%c0_3, %c1] : memref<16x26xf32, #tpu.memory_space<vmem>>, vector<16x1xf32>
    %c0_4 = arith.constant 0 : index
    %c2 = arith.constant 2 : index
    %3 = vector.load %arg1[%c0_4, %c2] : memref<16x26xf32, #tpu.memory_space<vmem>>, vector<16x1xf32>
    %c0_5 = arith.constant 0 : index
    %c3 = arith.constant 3 : index
    %4 = vector.load %arg1[%c0_5, %c3] : memref<16x26xf32, #tpu.memory_space<vmem>>, vector<16x1xf32>
    %cst = arith.constant dense<0.000000e+00> : vector<16xf32>
    %5 = vector.multi_reduction <add>, %0, %cst [1] : vector<16x128xf32> to vector<16xf32>
    %6 = vector.shape_cast %5 : vector<16xf32> to vector<16x1xf32>
    %7 = arith.mulf %0, %0 : vector<16x128xf32>
    %cst_6 = arith.constant dense<0.000000e+00> : vector<16xf32>
    %8 = vector.multi_reduction <add>, %7, %cst_6 [1] : vector<16x128xf32> to vector<16xf32>
    %9 = vector.shape_cast %8 : vector<16xf32> to vector<16x1xf32>
    %cst_7 = arith.constant 7.812500e-03 : f32
    %10 = vector.broadcast %cst_7 : f32 to vector<16x1xf32>
    %11 = arith.mulf %6, %10 : vector<16x1xf32>
    %cst_8 = arith.constant 7.812500e-03 : f32
    %12 = vector.broadcast %cst_8 : f32 to vector<16x1xf32>
    %13 = arith.mulf %9, %12 : vector<16x1xf32>
    %14 = arith.mulf %11, %11 : vector<16x1xf32>
    %15 = arith.subf %13, %14 : vector<16x1xf32>
    %cst_9 = arith.constant 0.000000e+00 : f32
    %16 = vector.broadcast %cst_9 : f32 to vector<16x1xf32>
    %17 = arith.maximumf %15, %16 : vector<16x1xf32>
    %cst_10 = arith.constant 1.000000e-03 : f32
    %18 = vector.broadcast %cst_10 : f32 to vector<16x1xf32>
    %19 = arith.addf %17, %18 : vector<16x1xf32>
    %20 = math.rsqrt %19 : vector<16x1xf32>
    %21 = arith.mulf %1, %20 : vector<16x1xf32>
    %22 = arith.mulf %11, %21 : vector<16x1xf32>
    %23 = arith.subf %2, %22 : vector<16x1xf32>
    %24 = arith.mulf %21, %6 : vector<16x1xf32>
    %cst_11 = arith.constant 1.280000e+02 : f32
    %25 = vector.broadcast %cst_11 : f32 to vector<16x1xf32>
    %26 = arith.mulf %25, %23 : vector<16x1xf32>
    %27 = arith.addf %24, %26 : vector<16x1xf32>
    %28 = arith.mulf %21, %21 : vector<16x1xf32>
    %29 = arith.mulf %28, %9 : vector<16x1xf32>
    %cst_12 = arith.constant 2.000000e+00 : f32
    %30 = vector.broadcast %cst_12 : f32 to vector<16x1xf32>
    %31 = arith.mulf %30, %21 : vector<16x1xf32>
    %32 = arith.mulf %31, %23 : vector<16x1xf32>
    %33 = arith.mulf %32, %6 : vector<16x1xf32>
    %34 = arith.addf %29, %33 : vector<16x1xf32>
    %cst_13 = arith.constant 1.280000e+02 : f32
    %35 = vector.broadcast %cst_13 : f32 to vector<16x1xf32>
    %36 = arith.mulf %35, %23 : vector<16x1xf32>
    %37 = arith.mulf %36, %23 : vector<16x1xf32>
    %38 = arith.addf %34, %37 : vector<16x1xf32>
    %cst_14 = arith.constant 1.280000e+02 : f32
    %39 = vector.broadcast %cst_14 : f32 to vector<16x1xf32>
    %40 = arith.divf %27, %39 : vector<16x1xf32>
    %cst_15 = arith.constant 1.280000e+02 : f32
    %41 = vector.broadcast %cst_15 : f32 to vector<16x1xf32>
    %42 = arith.divf %38, %41 : vector<16x1xf32>
    %43 = arith.mulf %40, %40 : vector<16x1xf32>
    %44 = arith.subf %42, %43 : vector<16x1xf32>
    %cst_16 = arith.constant 0.000000e+00 : f32
    %45 = vector.broadcast %cst_16 : f32 to vector<16x1xf32>
    %46 = arith.maximumf %44, %45 : vector<16x1xf32>
    %cst_17 = arith.constant 9.99999974E-6 : f32
    %47 = vector.broadcast %cst_17 : f32 to vector<16x1xf32>
    %48 = arith.addf %46, %47 : vector<16x1xf32>
    %49 = math.rsqrt %48 : vector<16x1xf32>
    %50 = arith.mulf %3, %49 : vector<16x1xf32>
    %51 = arith.mulf %40, %50 : vector<16x1xf32>
    %52 = arith.subf %4, %51 : vector<16x1xf32>
    %53 = arith.mulf %21, %50 : vector<16x1xf32>
    %54 = vector.broadcast %53 : vector<16x1xf32> to vector<16x128xf32>
    %55 = arith.mulf %0, %54 : vector<16x128xf32>
    %56 = arith.mulf %23, %50 : vector<16x1xf32>
    %57 = arith.addf %56, %52 : vector<16x1xf32>
    %58 = vector.broadcast %57 : vector<16x1xf32> to vector<16x128xf32>
    %59 = arith.addf %55, %58 : vector<16x128xf32>
    %cst_18 = arith.constant 0.000000e+00 : f32
    %60 = vector.broadcast %cst_18 : f32 to vector<16x128xf32>
    %61 = arith.maximumf %59, %60 : vector<16x128xf32>
    %c0_19 = arith.constant 0 : index
    %c0_20 = arith.constant 0 : index
    %c0_21 = arith.constant 0 : index
    %62 = vector.load %arg2[%c0_19, %c0_20, %c0_21] : memref<8x16x16xf32, #tpu.memory_space<vmem>>, vector<1x16x16xf32>
    %63 = vector.shape_cast %62 : vector<1x16x16xf32> to vector<16x16xf32>
    %cst_22 = arith.constant dense<0.000000e+00> : vector<16x128xf32>
    %64 = tpu.matmul %63, %61, %cst_22 {dimension_numbers = #tpu.dot_dimension_numbers<[1], [0], [0], [1], [0, 0, 1, 1], [], []>} : vector<16x16xf32>, vector<16x128xf32>, vector<16x128xf32> -> vector<16x128xf32>
    %c0_23 = arith.constant 0 : index
    %c4 = arith.constant 4 : index
    %65 = vector.load %arg1[%c0_23, %c4] : memref<16x26xf32, #tpu.memory_space<vmem>>, vector<16x1xf32>
    %c0_24 = arith.constant 0 : index
    %c5 = arith.constant 5 : index
    %66 = vector.load %arg1[%c0_24, %c5] : memref<16x26xf32, #tpu.memory_space<vmem>>, vector<16x1xf32>
    %c0_25 = arith.constant 0 : index
    %c6 = arith.constant 6 : index
    %67 = vector.load %arg1[%c0_25, %c6] : memref<16x26xf32, #tpu.memory_space<vmem>>, vector<16x1xf32>
    %c0_26 = arith.constant 0 : index
    %c7 = arith.constant 7 : index
    %68 = vector.load %arg1[%c0_26, %c7] : memref<16x26xf32, #tpu.memory_space<vmem>>, vector<16x1xf32>
    %cst_27 = arith.constant dense<0.000000e+00> : vector<16xf32>
    %69 = vector.multi_reduction <add>, %64, %cst_27 [1] : vector<16x128xf32> to vector<16xf32>
    %70 = vector.shape_cast %69 : vector<16xf32> to vector<16x1xf32>
    %71 = arith.mulf %64, %64 : vector<16x128xf32>
    %cst_28 = arith.constant dense<0.000000e+00> : vector<16xf32>
    %72 = vector.multi_reduction <add>, %71, %cst_28 [1] : vector<16x128xf32> to vector<16xf32>
    %73 = vector.shape_cast %72 : vector<16xf32> to vector<16x1xf32>
    %cst_29 = arith.constant 7.812500e-03 : f32
    %74 = vector.broadcast %cst_29 : f32 to vector<16x1xf32>
    %75 = arith.mulf %70, %74 : vector<16x1xf32>
    %cst_30 = arith.constant 7.812500e-03 : f32
    %76 = vector.broadcast %cst_30 : f32 to vector<16x1xf32>
    %77 = arith.mulf %73, %76 : vector<16x1xf32>
    %78 = arith.mulf %75, %75 : vector<16x1xf32>
    %79 = arith.subf %77, %78 : vector<16x1xf32>
    %cst_31 = arith.constant 0.000000e+00 : f32
    %80 = vector.broadcast %cst_31 : f32 to vector<16x1xf32>
    %81 = arith.maximumf %79, %80 : vector<16x1xf32>
    %cst_32 = arith.constant 1.000000e-03 : f32
    %82 = vector.broadcast %cst_32 : f32 to vector<16x1xf32>
    %83 = arith.addf %81, %82 : vector<16x1xf32>
    %84 = math.rsqrt %83 : vector<16x1xf32>
    %85 = arith.mulf %65, %84 : vector<16x1xf32>
    %86 = arith.mulf %75, %85 : vector<16x1xf32>
    %87 = arith.subf %66, %86 : vector<16x1xf32>
    %88 = arith.mulf %85, %70 : vector<16x1xf32>
    %cst_33 = arith.constant 1.280000e+02 : f32
    %89 = vector.broadcast %cst_33 : f32 to vector<16x1xf32>
    %90 = arith.mulf %89, %87 : vector<16x1xf32>
    %91 = arith.addf %88, %90 : vector<16x1xf32>
    %92 = arith.mulf %85, %85 : vector<16x1xf32>
    %93 = arith.mulf %92, %73 : vector<16x1xf32>
    %cst_34 = arith.constant 2.000000e+00 : f32
    %94 = vector.broadcast %cst_34 : f32 to vector<16x1xf32>
    %95 = arith.mulf %94, %85 : vector<16x1xf32>
    %96 = arith.mulf %95, %87 : vector<16x1xf32>
    %97 = arith.mulf %96, %70 : vector<16x1xf32>
    %98 = arith.addf %93, %97 : vector<16x1xf32>
    %cst_35 = arith.constant 1.280000e+02 : f32
    %99 = vector.broadcast %cst_35 : f32 to vector<16x1xf32>
    %100 = arith.mulf %99, %87 : vector<16x1xf32>
    %101 = arith.mulf %100, %87 : vector<16x1xf32>
    %102 = arith.addf %98, %101 : vector<16x1xf32>
    %cst_36 = arith.constant 1.280000e+02 : f32
    %103 = vector.broadcast %cst_36 : f32 to vector<16x1xf32>
    %104 = arith.divf %91, %103 : vector<16x1xf32>
    %cst_37 = arith.constant 1.280000e+02 : f32
    %105 = vector.broadcast %cst_37 : f32 to vector<16x1xf32>
    %106 = arith.divf %102, %105 : vector<16x1xf32>
    %107 = arith.mulf %104, %104 : vector<16x1xf32>
    %108 = arith.subf %106, %107 : vector<16x1xf32>
    %cst_38 = arith.constant 0.000000e+00 : f32
    %109 = vector.broadcast %cst_38 : f32 to vector<16x1xf32>
    %110 = arith.maximumf %108, %109 : vector<16x1xf32>
    %cst_39 = arith.constant 9.99999974E-6 : f32
    %111 = vector.broadcast %cst_39 : f32 to vector<16x1xf32>
    %112 = arith.addf %110, %111 : vector<16x1xf32>
    %113 = math.rsqrt %112 : vector<16x1xf32>
    %114 = arith.mulf %67, %113 : vector<16x1xf32>
    %115 = arith.mulf %104, %114 : vector<16x1xf32>
    %116 = arith.subf %68, %115 : vector<16x1xf32>
    %117 = arith.mulf %85, %114 : vector<16x1xf32>
    %118 = vector.broadcast %117 : vector<16x1xf32> to vector<16x128xf32>
    %119 = arith.mulf %64, %118 : vector<16x128xf32>
    %120 = arith.mulf %87, %114 : vector<16x1xf32>
    %121 = arith.addf %120, %116 : vector<16x1xf32>
    %122 = vector.broadcast %121 : vector<16x1xf32> to vector<16x128xf32>
    %123 = arith.addf %119, %122 : vector<16x128xf32>
    %cst_40 = arith.constant 0.000000e+00 : f32
    %124 = vector.broadcast %cst_40 : f32 to vector<16x128xf32>
    %125 = arith.maximumf %123, %124 : vector<16x128xf32>
    %c1_41 = arith.constant 1 : index
    %c0_42 = arith.constant 0 : index
    %c0_43 = arith.constant 0 : index
    %126 = vector.load %arg2[%c1_41, %c0_42, %c0_43] : memref<8x16x16xf32, #tpu.memory_space<vmem>>, vector<1x16x16xf32>
    %127 = vector.shape_cast %126 : vector<1x16x16xf32> to vector<16x16xf32>
    %cst_44 = arith.constant dense<0.000000e+00> : vector<16x128xf32>
    %128 = tpu.matmul %127, %125, %cst_44 {dimension_numbers = #tpu.dot_dimension_numbers<[1], [0], [0], [1], [0, 0, 1, 1], [], []>} : vector<16x16xf32>, vector<16x128xf32>, vector<16x128xf32> -> vector<16x128xf32>
    %c0_45 = arith.constant 0 : index
    %c8 = arith.constant 8 : index
    %129 = vector.load %arg1[%c0_45, %c8] : memref<16x26xf32, #tpu.memory_space<vmem>>, vector<16x1xf32>
    %c0_46 = arith.constant 0 : index
    %c9 = arith.constant 9 : index
    %130 = vector.load %arg1[%c0_46, %c9] : memref<16x26xf32, #tpu.memory_space<vmem>>, vector<16x1xf32>
    %c0_47 = arith.constant 0 : index
    %c10 = arith.constant 10 : index
    %131 = vector.load %arg1[%c0_47, %c10] : memref<16x26xf32, #tpu.memory_space<vmem>>, vector<16x1xf32>
    %c0_48 = arith.constant 0 : index
    %c11 = arith.constant 11 : index
    %132 = vector.load %arg1[%c0_48, %c11] : memref<16x26xf32, #tpu.memory_space<vmem>>, vector<16x1xf32>
    %cst_49 = arith.constant dense<0.000000e+00> : vector<16xf32>
    %133 = vector.multi_reduction <add>, %128, %cst_49 [1] : vector<16x128xf32> to vector<16xf32>
    %134 = vector.shape_cast %133 : vector<16xf32> to vector<16x1xf32>
    %135 = arith.mulf %128, %128 : vector<16x128xf32>
    %cst_50 = arith.constant dense<0.000000e+00> : vector<16xf32>
    %136 = vector.multi_reduction <add>, %135, %cst_50 [1] : vector<16x128xf32> to vector<16xf32>
    %137 = vector.shape_cast %136 : vector<16xf32> to vector<16x1xf32>
    %cst_51 = arith.constant 7.812500e-03 : f32
    %138 = vector.broadcast %cst_51 : f32 to vector<16x1xf32>
    %139 = arith.mulf %134, %138 : vector<16x1xf32>
    %cst_52 = arith.constant 7.812500e-03 : f32
    %140 = vector.broadcast %cst_52 : f32 to vector<16x1xf32>
    %141 = arith.mulf %137, %140 : vector<16x1xf32>
    %142 = arith.mulf %139, %139 : vector<16x1xf32>
    %143 = arith.subf %141, %142 : vector<16x1xf32>
    %cst_53 = arith.constant 0.000000e+00 : f32
    %144 = vector.broadcast %cst_53 : f32 to vector<16x1xf32>
    %145 = arith.maximumf %143, %144 : vector<16x1xf32>
    %cst_54 = arith.constant 1.000000e-03 : f32
    %146 = vector.broadcast %cst_54 : f32 to vector<16x1xf32>
    %147 = arith.addf %145, %146 : vector<16x1xf32>
    %148 = math.rsqrt %147 : vector<16x1xf32>
    %149 = arith.mulf %129, %148 : vector<16x1xf32>
    %150 = arith.mulf %139, %149 : vector<16x1xf32>
    %151 = arith.subf %130, %150 : vector<16x1xf32>
    %152 = arith.mulf %149, %134 : vector<16x1xf32>
    %cst_55 = arith.constant 1.280000e+02 : f32
    %153 = vector.broadcast %cst_55 : f32 to vector<16x1xf32>
    %154 = arith.mulf %153, %151 : vector<16x1xf32>
    %155 = arith.addf %152, %154 : vector<16x1xf32>
    %156 = arith.mulf %149, %149 : vector<16x1xf32>
    %157 = arith.mulf %156, %137 : vector<16x1xf32>
    %cst_56 = arith.constant 2.000000e+00 : f32
    %158 = vector.broadcast %cst_56 : f32 to vector<16x1xf32>
    %159 = arith.mulf %158, %149 : vector<16x1xf32>
    %160 = arith.mulf %159, %151 : vector<16x1xf32>
    %161 = arith.mulf %160, %134 : vector<16x1xf32>
    %162 = arith.addf %157, %161 : vector<16x1xf32>
    %cst_57 = arith.constant 1.280000e+02 : f32
    %163 = vector.broadcast %cst_57 : f32 to vector<16x1xf32>
    %164 = arith.mulf %163, %151 : vector<16x1xf32>
    %165 = arith.mulf %164, %151 : vector<16x1xf32>
    %166 = arith.addf %162, %165 : vector<16x1xf32>
    %cst_58 = arith.constant 1.280000e+02 : f32
    %167 = vector.broadcast %cst_58 : f32 to vector<16x1xf32>
    %168 = arith.divf %155, %167 : vector<16x1xf32>
    %cst_59 = arith.constant 1.280000e+02 : f32
    %169 = vector.broadcast %cst_59 : f32 to vector<16x1xf32>
    %170 = arith.divf %166, %169 : vector<16x1xf32>
    %171 = arith.mulf %168, %168 : vector<16x1xf32>
    %172 = arith.subf %170, %171 : vector<16x1xf32>
    %cst_60 = arith.constant 0.000000e+00 : f32
    %173 = vector.broadcast %cst_60 : f32 to vector<16x1xf32>
    %174 = arith.maximumf %172, %173 : vector<16x1xf32>
    %cst_61 = arith.constant 9.99999974E-6 : f32
    %175 = vector.broadcast %cst_61 : f32 to vector<16x1xf32>
    %176 = arith.addf %174, %175 : vector<16x1xf32>
    %177 = math.rsqrt %176 : vector<16x1xf32>
    %178 = arith.mulf %131, %177 : vector<16x1xf32>
    %179 = arith.mulf %168, %178 : vector<16x1xf32>
    %180 = arith.subf %132, %179 : vector<16x1xf32>
    %181 = arith.mulf %149, %178 : vector<16x1xf32>
    %182 = vector.broadcast %181 : vector<16x1xf32> to vector<16x128xf32>
    %183 = arith.mulf %128, %182 : vector<16x128xf32>
    %184 = arith.mulf %151, %178 : vector<16x1xf32>
    %185 = arith.addf %184, %180 : vector<16x1xf32>
    %186 = vector.broadcast %185 : vector<16x1xf32> to vector<16x128xf32>
    %187 = arith.addf %183, %186 : vector<16x128xf32>
    %c2_62 = arith.constant 2 : index
    %c0_63 = arith.constant 0 : index
    %c0_64 = arith.constant 0 : index
    %188 = vector.load %arg2[%c2_62, %c0_63, %c0_64] : memref<8x16x16xf32, #tpu.memory_space<vmem>>, vector<1x16x16xf32>
    %189 = vector.shape_cast %188 : vector<1x16x16xf32> to vector<16x16xf32>
    %cst_65 = arith.constant dense<0.000000e+00> : vector<16x128xf32>
    %190 = tpu.matmul %189, %187, %cst_65 {dimension_numbers = #tpu.dot_dimension_numbers<[1], [0], [0], [1], [0, 0, 1, 1], [], []>} : vector<16x16xf32>, vector<16x128xf32>, vector<16x128xf32> -> vector<16x128xf32>
    %c3_66 = arith.constant 3 : index
    %c0_67 = arith.constant 0 : index
    %c0_68 = arith.constant 0 : index
    %191 = vector.load %arg2[%c3_66, %c0_67, %c0_68] : memref<8x16x16xf32, #tpu.memory_space<vmem>>, vector<1x16x16xf32>
    %192 = vector.shape_cast %191 : vector<1x16x16xf32> to vector<16x16xf32>
    %cst_69 = arith.constant dense<0.000000e+00> : vector<16x128xf32>
    %193 = tpu.matmul %192, %0, %cst_69 {dimension_numbers = #tpu.dot_dimension_numbers<[1], [0], [0], [1], [0, 0, 1, 1], [], []>} : vector<16x16xf32>, vector<16x128xf32>, vector<16x128xf32> -> vector<16x128xf32>
    %194 = arith.addf %190, %193 : vector<16x128xf32>
    %c0_70 = arith.constant 0 : index
    %c12 = arith.constant 12 : index
    %195 = vector.load %arg1[%c0_70, %c12] : memref<16x26xf32, #tpu.memory_space<vmem>>, vector<16x1xf32>
    %196 = vector.broadcast %195 : vector<16x1xf32> to vector<16x128xf32>
    %197 = arith.addf %194, %196 : vector<16x128xf32>
    %c0_71 = arith.constant 0 : index
    %c13 = arith.constant 13 : index
    %198 = vector.load %arg1[%c0_71, %c13] : memref<16x26xf32, #tpu.memory_space<vmem>>, vector<16x1xf32>
    %c0_72 = arith.constant 0 : index
    %c14 = arith.constant 14 : index
    %199 = vector.load %arg1[%c0_72, %c14] : memref<16x26xf32, #tpu.memory_space<vmem>>, vector<16x1xf32>
    %c0_73 = arith.constant 0 : index
    %c15 = arith.constant 15 : index
    %200 = vector.load %arg1[%c0_73, %c15] : memref<16x26xf32, #tpu.memory_space<vmem>>, vector<16x1xf32>
    %c0_74 = arith.constant 0 : index
    %c16 = arith.constant 16 : index
    %201 = vector.load %arg1[%c0_74, %c16] : memref<16x26xf32, #tpu.memory_space<vmem>>, vector<16x1xf32>
    %cst_75 = arith.constant dense<0.000000e+00> : vector<16xf32>
    %202 = vector.multi_reduction <add>, %197, %cst_75 [1] : vector<16x128xf32> to vector<16xf32>
    %203 = vector.shape_cast %202 : vector<16xf32> to vector<16x1xf32>
    %204 = arith.mulf %197, %197 : vector<16x128xf32>
    %cst_76 = arith.constant dense<0.000000e+00> : vector<16xf32>
    %205 = vector.multi_reduction <add>, %204, %cst_76 [1] : vector<16x128xf32> to vector<16xf32>
    %206 = vector.shape_cast %205 : vector<16xf32> to vector<16x1xf32>
    %cst_77 = arith.constant 7.812500e-03 : f32
    %207 = vector.broadcast %cst_77 : f32 to vector<16x1xf32>
    %208 = arith.mulf %203, %207 : vector<16x1xf32>
    %cst_78 = arith.constant 7.812500e-03 : f32
    %209 = vector.broadcast %cst_78 : f32 to vector<16x1xf32>
    %210 = arith.mulf %206, %209 : vector<16x1xf32>
    %211 = arith.mulf %208, %208 : vector<16x1xf32>
    %212 = arith.subf %210, %211 : vector<16x1xf32>
    %cst_79 = arith.constant 0.000000e+00 : f32
    %213 = vector.broadcast %cst_79 : f32 to vector<16x1xf32>
    %214 = arith.maximumf %212, %213 : vector<16x1xf32>
    %cst_80 = arith.constant 1.000000e-03 : f32
    %215 = vector.broadcast %cst_80 : f32 to vector<16x1xf32>
    %216 = arith.addf %214, %215 : vector<16x1xf32>
    %217 = math.rsqrt %216 : vector<16x1xf32>
    %218 = arith.mulf %198, %217 : vector<16x1xf32>
    %219 = arith.mulf %208, %218 : vector<16x1xf32>
    %220 = arith.subf %199, %219 : vector<16x1xf32>
    %221 = arith.mulf %218, %203 : vector<16x1xf32>
    %cst_81 = arith.constant 1.280000e+02 : f32
    %222 = vector.broadcast %cst_81 : f32 to vector<16x1xf32>
    %223 = arith.mulf %222, %220 : vector<16x1xf32>
    %224 = arith.addf %221, %223 : vector<16x1xf32>
    %225 = arith.mulf %218, %218 : vector<16x1xf32>
    %226 = arith.mulf %225, %206 : vector<16x1xf32>
    %cst_82 = arith.constant 2.000000e+00 : f32
    %227 = vector.broadcast %cst_82 : f32 to vector<16x1xf32>
    %228 = arith.mulf %227, %218 : vector<16x1xf32>
    %229 = arith.mulf %228, %220 : vector<16x1xf32>
    %230 = arith.mulf %229, %203 : vector<16x1xf32>
    %231 = arith.addf %226, %230 : vector<16x1xf32>
    %cst_83 = arith.constant 1.280000e+02 : f32
    %232 = vector.broadcast %cst_83 : f32 to vector<16x1xf32>
    %233 = arith.mulf %232, %220 : vector<16x1xf32>
    %234 = arith.mulf %233, %220 : vector<16x1xf32>
    %235 = arith.addf %231, %234 : vector<16x1xf32>
    %cst_84 = arith.constant 1.280000e+02 : f32
    %236 = vector.broadcast %cst_84 : f32 to vector<16x1xf32>
    %237 = arith.divf %224, %236 : vector<16x1xf32>
    %cst_85 = arith.constant 1.280000e+02 : f32
    %238 = vector.broadcast %cst_85 : f32 to vector<16x1xf32>
    %239 = arith.divf %235, %238 : vector<16x1xf32>
    %240 = arith.mulf %237, %237 : vector<16x1xf32>
    %241 = arith.subf %239, %240 : vector<16x1xf32>
    %cst_86 = arith.constant 0.000000e+00 : f32
    %242 = vector.broadcast %cst_86 : f32 to vector<16x1xf32>
    %243 = arith.maximumf %241, %242 : vector<16x1xf32>
    %cst_87 = arith.constant 9.99999974E-6 : f32
    %244 = vector.broadcast %cst_87 : f32 to vector<16x1xf32>
    %245 = arith.addf %243, %244 : vector<16x1xf32>
    %246 = math.rsqrt %245 : vector<16x1xf32>
    %247 = arith.mulf %200, %246 : vector<16x1xf32>
    %248 = arith.mulf %237, %247 : vector<16x1xf32>
    %249 = arith.subf %201, %248 : vector<16x1xf32>
    %250 = arith.mulf %218, %247 : vector<16x1xf32>
    %251 = vector.broadcast %250 : vector<16x1xf32> to vector<16x128xf32>
    %252 = arith.mulf %197, %251 : vector<16x128xf32>
    %253 = arith.mulf %220, %247 : vector<16x1xf32>
    %254 = arith.addf %253, %249 : vector<16x1xf32>
    %255 = vector.broadcast %254 : vector<16x1xf32> to vector<16x128xf32>
    %256 = arith.addf %252, %255 : vector<16x128xf32>
    %cst_88 = arith.constant 0.000000e+00 : f32
    %257 = vector.broadcast %cst_88 : f32 to vector<16x128xf32>
    %258 = arith.maximumf %256, %257 : vector<16x128xf32>
    %c4_89 = arith.constant 4 : index
    %c0_90 = arith.constant 0 : index
    %c0_91 = arith.constant 0 : index
    %259 = vector.load %arg2[%c4_89, %c0_90, %c0_91] : memref<8x16x16xf32, #tpu.memory_space<vmem>>, vector<1x16x16xf32>
    %260 = vector.shape_cast %259 : vector<1x16x16xf32> to vector<16x16xf32>
    %cst_92 = arith.constant dense<0.000000e+00> : vector<16x128xf32>
    %261 = tpu.matmul %260, %258, %cst_92 {dimension_numbers = #tpu.dot_dimension_numbers<[1], [0], [0], [1], [0, 0, 1, 1], [], []>} : vector<16x16xf32>, vector<16x128xf32>, vector<16x128xf32> -> vector<16x128xf32>
    %c0_93 = arith.constant 0 : index
    %c17 = arith.constant 17 : index
    %262 = vector.load %arg1[%c0_93, %c17] : memref<16x26xf32, #tpu.memory_space<vmem>>, vector<16x1xf32>
    %c0_94 = arith.constant 0 : index
    %c18 = arith.constant 18 : index
    %263 = vector.load %arg1[%c0_94, %c18] : memref<16x26xf32, #tpu.memory_space<vmem>>, vector<16x1xf32>
    %c0_95 = arith.constant 0 : index
    %c19 = arith.constant 19 : index
    %264 = vector.load %arg1[%c0_95, %c19] : memref<16x26xf32, #tpu.memory_space<vmem>>, vector<16x1xf32>
    %c0_96 = arith.constant 0 : index
    %c20 = arith.constant 20 : index
    %265 = vector.load %arg1[%c0_96, %c20] : memref<16x26xf32, #tpu.memory_space<vmem>>, vector<16x1xf32>
    %cst_97 = arith.constant dense<0.000000e+00> : vector<16xf32>
    %266 = vector.multi_reduction <add>, %261, %cst_97 [1] : vector<16x128xf32> to vector<16xf32>
    %267 = vector.shape_cast %266 : vector<16xf32> to vector<16x1xf32>
    %268 = arith.mulf %261, %261 : vector<16x128xf32>
    %cst_98 = arith.constant dense<0.000000e+00> : vector<16xf32>
    %269 = vector.multi_reduction <add>, %268, %cst_98 [1] : vector<16x128xf32> to vector<16xf32>
    %270 = vector.shape_cast %269 : vector<16xf32> to vector<16x1xf32>
    %cst_99 = arith.constant 7.812500e-03 : f32
    %271 = vector.broadcast %cst_99 : f32 to vector<16x1xf32>
    %272 = arith.mulf %267, %271 : vector<16x1xf32>
    %cst_100 = arith.constant 7.812500e-03 : f32
    %273 = vector.broadcast %cst_100 : f32 to vector<16x1xf32>
    %274 = arith.mulf %270, %273 : vector<16x1xf32>
    %275 = arith.mulf %272, %272 : vector<16x1xf32>
    %276 = arith.subf %274, %275 : vector<16x1xf32>
    %cst_101 = arith.constant 0.000000e+00 : f32
    %277 = vector.broadcast %cst_101 : f32 to vector<16x1xf32>
    %278 = arith.maximumf %276, %277 : vector<16x1xf32>
    %cst_102 = arith.constant 1.000000e-03 : f32
    %279 = vector.broadcast %cst_102 : f32 to vector<16x1xf32>
    %280 = arith.addf %278, %279 : vector<16x1xf32>
    %281 = math.rsqrt %280 : vector<16x1xf32>
    %282 = arith.mulf %262, %281 : vector<16x1xf32>
    %283 = arith.mulf %272, %282 : vector<16x1xf32>
    %284 = arith.subf %263, %283 : vector<16x1xf32>
    %285 = arith.mulf %282, %267 : vector<16x1xf32>
    %cst_103 = arith.constant 1.280000e+02 : f32
    %286 = vector.broadcast %cst_103 : f32 to vector<16x1xf32>
    %287 = arith.mulf %286, %284 : vector<16x1xf32>
    %288 = arith.addf %285, %287 : vector<16x1xf32>
    %289 = arith.mulf %282, %282 : vector<16x1xf32>
    %290 = arith.mulf %289, %270 : vector<16x1xf32>
    %cst_104 = arith.constant 2.000000e+00 : f32
    %291 = vector.broadcast %cst_104 : f32 to vector<16x1xf32>
    %292 = arith.mulf %291, %282 : vector<16x1xf32>
    %293 = arith.mulf %292, %284 : vector<16x1xf32>
    %294 = arith.mulf %293, %267 : vector<16x1xf32>
    %295 = arith.addf %290, %294 : vector<16x1xf32>
    %cst_105 = arith.constant 1.280000e+02 : f32
    %296 = vector.broadcast %cst_105 : f32 to vector<16x1xf32>
    %297 = arith.mulf %296, %284 : vector<16x1xf32>
    %298 = arith.mulf %297, %284 : vector<16x1xf32>
    %299 = arith.addf %295, %298 : vector<16x1xf32>
    %cst_106 = arith.constant 1.280000e+02 : f32
    %300 = vector.broadcast %cst_106 : f32 to vector<16x1xf32>
    %301 = arith.divf %288, %300 : vector<16x1xf32>
    %cst_107 = arith.constant 1.280000e+02 : f32
    %302 = vector.broadcast %cst_107 : f32 to vector<16x1xf32>
    %303 = arith.divf %299, %302 : vector<16x1xf32>
    %304 = arith.mulf %301, %301 : vector<16x1xf32>
    %305 = arith.subf %303, %304 : vector<16x1xf32>
    %cst_108 = arith.constant 0.000000e+00 : f32
    %306 = vector.broadcast %cst_108 : f32 to vector<16x1xf32>
    %307 = arith.maximumf %305, %306 : vector<16x1xf32>
    %cst_109 = arith.constant 9.99999974E-6 : f32
    %308 = vector.broadcast %cst_109 : f32 to vector<16x1xf32>
    %309 = arith.addf %307, %308 : vector<16x1xf32>
    %310 = math.rsqrt %309 : vector<16x1xf32>
    %311 = arith.mulf %264, %310 : vector<16x1xf32>
    %312 = arith.mulf %301, %311 : vector<16x1xf32>
    %313 = arith.subf %265, %312 : vector<16x1xf32>
    %314 = arith.mulf %282, %311 : vector<16x1xf32>
    %315 = vector.broadcast %314 : vector<16x1xf32> to vector<16x128xf32>
    %316 = arith.mulf %261, %315 : vector<16x128xf32>
    %317 = arith.mulf %284, %311 : vector<16x1xf32>
    %318 = arith.addf %317, %313 : vector<16x1xf32>
    %319 = vector.broadcast %318 : vector<16x1xf32> to vector<16x128xf32>
    %320 = arith.addf %316, %319 : vector<16x128xf32>
    %cst_110 = arith.constant 0.000000e+00 : f32
    %321 = vector.broadcast %cst_110 : f32 to vector<16x128xf32>
    %322 = arith.maximumf %320, %321 : vector<16x128xf32>
    %c5_111 = arith.constant 5 : index
    %c0_112 = arith.constant 0 : index
    %c0_113 = arith.constant 0 : index
    %323 = vector.load %arg2[%c5_111, %c0_112, %c0_113] : memref<8x16x16xf32, #tpu.memory_space<vmem>>, vector<1x16x16xf32>
    %324 = vector.shape_cast %323 : vector<1x16x16xf32> to vector<16x16xf32>
    %cst_114 = arith.constant dense<0.000000e+00> : vector<16x128xf32>
    %325 = tpu.matmul %324, %322, %cst_114 {dimension_numbers = #tpu.dot_dimension_numbers<[1], [0], [0], [1], [0, 0, 1, 1], [], []>} : vector<16x16xf32>, vector<16x128xf32>, vector<16x128xf32> -> vector<16x128xf32>
    %c0_115 = arith.constant 0 : index
    %c21 = arith.constant 21 : index
    %326 = vector.load %arg1[%c0_115, %c21] : memref<16x26xf32, #tpu.memory_space<vmem>>, vector<16x1xf32>
    %c0_116 = arith.constant 0 : index
    %c22 = arith.constant 22 : index
    %327 = vector.load %arg1[%c0_116, %c22] : memref<16x26xf32, #tpu.memory_space<vmem>>, vector<16x1xf32>
    %c0_117 = arith.constant 0 : index
    %c23 = arith.constant 23 : index
    %328 = vector.load %arg1[%c0_117, %c23] : memref<16x26xf32, #tpu.memory_space<vmem>>, vector<16x1xf32>
    %c0_118 = arith.constant 0 : index
    %c24 = arith.constant 24 : index
    %329 = vector.load %arg1[%c0_118, %c24] : memref<16x26xf32, #tpu.memory_space<vmem>>, vector<16x1xf32>
    %cst_119 = arith.constant dense<0.000000e+00> : vector<16xf32>
    %330 = vector.multi_reduction <add>, %325, %cst_119 [1] : vector<16x128xf32> to vector<16xf32>
    %331 = vector.shape_cast %330 : vector<16xf32> to vector<16x1xf32>
    %332 = arith.mulf %325, %325 : vector<16x128xf32>
    %cst_120 = arith.constant dense<0.000000e+00> : vector<16xf32>
    %333 = vector.multi_reduction <add>, %332, %cst_120 [1] : vector<16x128xf32> to vector<16xf32>
    %334 = vector.shape_cast %333 : vector<16xf32> to vector<16x1xf32>
    %cst_121 = arith.constant 7.812500e-03 : f32
    %335 = vector.broadcast %cst_121 : f32 to vector<16x1xf32>
    %336 = arith.mulf %331, %335 : vector<16x1xf32>
    %cst_122 = arith.constant 7.812500e-03 : f32
    %337 = vector.broadcast %cst_122 : f32 to vector<16x1xf32>
    %338 = arith.mulf %334, %337 : vector<16x1xf32>
    %339 = arith.mulf %336, %336 : vector<16x1xf32>
    %340 = arith.subf %338, %339 : vector<16x1xf32>
    %cst_123 = arith.constant 0.000000e+00 : f32
    %341 = vector.broadcast %cst_123 : f32 to vector<16x1xf32>
    %342 = arith.maximumf %340, %341 : vector<16x1xf32>
    %cst_124 = arith.constant 1.000000e-03 : f32
    %343 = vector.broadcast %cst_124 : f32 to vector<16x1xf32>
    %344 = arith.addf %342, %343 : vector<16x1xf32>
    %345 = math.rsqrt %344 : vector<16x1xf32>
    %346 = arith.mulf %326, %345 : vector<16x1xf32>
    %347 = arith.mulf %336, %346 : vector<16x1xf32>
    %348 = arith.subf %327, %347 : vector<16x1xf32>
    %349 = arith.mulf %346, %331 : vector<16x1xf32>
    %cst_125 = arith.constant 1.280000e+02 : f32
    %350 = vector.broadcast %cst_125 : f32 to vector<16x1xf32>
    %351 = arith.mulf %350, %348 : vector<16x1xf32>
    %352 = arith.addf %349, %351 : vector<16x1xf32>
    %353 = arith.mulf %346, %346 : vector<16x1xf32>
    %354 = arith.mulf %353, %334 : vector<16x1xf32>
    %cst_126 = arith.constant 2.000000e+00 : f32
    %355 = vector.broadcast %cst_126 : f32 to vector<16x1xf32>
    %356 = arith.mulf %355, %346 : vector<16x1xf32>
    %357 = arith.mulf %356, %348 : vector<16x1xf32>
    %358 = arith.mulf %357, %331 : vector<16x1xf32>
    %359 = arith.addf %354, %358 : vector<16x1xf32>
    %cst_127 = arith.constant 1.280000e+02 : f32
    %360 = vector.broadcast %cst_127 : f32 to vector<16x1xf32>
    %361 = arith.mulf %360, %348 : vector<16x1xf32>
    %362 = arith.mulf %361, %348 : vector<16x1xf32>
    %363 = arith.addf %359, %362 : vector<16x1xf32>
    %cst_128 = arith.constant 1.280000e+02 : f32
    %364 = vector.broadcast %cst_128 : f32 to vector<16x1xf32>
    %365 = arith.divf %352, %364 : vector<16x1xf32>
    %cst_129 = arith.constant 1.280000e+02 : f32
    %366 = vector.broadcast %cst_129 : f32 to vector<16x1xf32>
    %367 = arith.divf %363, %366 : vector<16x1xf32>
    %368 = arith.mulf %365, %365 : vector<16x1xf32>
    %369 = arith.subf %367, %368 : vector<16x1xf32>
    %cst_130 = arith.constant 0.000000e+00 : f32
    %370 = vector.broadcast %cst_130 : f32 to vector<16x1xf32>
    %371 = arith.maximumf %369, %370 : vector<16x1xf32>
    %cst_131 = arith.constant 9.99999974E-6 : f32
    %372 = vector.broadcast %cst_131 : f32 to vector<16x1xf32>
    %373 = arith.addf %371, %372 : vector<16x1xf32>
    %374 = math.rsqrt %373 : vector<16x1xf32>
    %375 = arith.mulf %328, %374 : vector<16x1xf32>
    %376 = arith.mulf %365, %375 : vector<16x1xf32>
    %377 = arith.subf %329, %376 : vector<16x1xf32>
    %378 = arith.mulf %346, %375 : vector<16x1xf32>
    %379 = vector.broadcast %378 : vector<16x1xf32> to vector<16x128xf32>
    %380 = arith.mulf %325, %379 : vector<16x128xf32>
    %381 = arith.mulf %348, %375 : vector<16x1xf32>
    %382 = arith.addf %381, %377 : vector<16x1xf32>
    %383 = vector.broadcast %382 : vector<16x1xf32> to vector<16x128xf32>
    %384 = arith.addf %380, %383 : vector<16x128xf32>
    %c6_132 = arith.constant 6 : index
    %c0_133 = arith.constant 0 : index
    %c0_134 = arith.constant 0 : index
    %385 = vector.load %arg2[%c6_132, %c0_133, %c0_134] : memref<8x16x16xf32, #tpu.memory_space<vmem>>, vector<1x16x16xf32>
    %386 = vector.shape_cast %385 : vector<1x16x16xf32> to vector<16x16xf32>
    %cst_135 = arith.constant dense<0.000000e+00> : vector<16x128xf32>
    %387 = tpu.matmul %386, %384, %cst_135 {dimension_numbers = #tpu.dot_dimension_numbers<[1], [0], [0], [1], [0, 0, 1, 1], [], []>} : vector<16x16xf32>, vector<16x128xf32>, vector<16x128xf32> -> vector<16x128xf32>
    %c7_136 = arith.constant 7 : index
    %c0_137 = arith.constant 0 : index
    %c0_138 = arith.constant 0 : index
    %388 = vector.load %arg2[%c7_136, %c0_137, %c0_138] : memref<8x16x16xf32, #tpu.memory_space<vmem>>, vector<1x16x16xf32>
    %389 = vector.shape_cast %388 : vector<1x16x16xf32> to vector<16x16xf32>
    %cst_139 = arith.constant dense<0.000000e+00> : vector<16x128xf32>
    %390 = tpu.matmul %389, %197, %cst_139 {dimension_numbers = #tpu.dot_dimension_numbers<[1], [0], [0], [1], [0, 0, 1, 1], [], []>} : vector<16x16xf32>, vector<16x128xf32>, vector<16x128xf32> -> vector<16x128xf32>
    %391 = arith.addf %387, %390 : vector<16x128xf32>
    %c0_140 = arith.constant 0 : index
    %c25 = arith.constant 25 : index
    %392 = vector.load %arg1[%c0_140, %c25] : memref<16x26xf32, #tpu.memory_space<vmem>>, vector<16x1xf32>
    %393 = vector.broadcast %392 : vector<16x1xf32> to vector<16x128xf32>
    %394 = arith.addf %391, %393 : vector<16x128xf32>
    %c0_141 = arith.constant 0 : index
    %c0_142 = arith.constant 0 : index
    %395 = vector.load %arg3[%c0_141, %c0_142] : memref<16x128xf32, #tpu.memory_space<vmem>>, vector<16x128xf32>
    tpu.vector_store %arg3[%c0_141, %c0_142], %394 {strides = array<i32>} : memref<16x128xf32, #tpu.memory_space<vmem>>, vector<16x128xf32>,
    return
  }
}

</mosaic_0001>

<llo_original>
// kernel: tpu_custom_call.1
$region0: #{tpu_custom_call.1}
  #allocation0 [shape = 'u32[]', space=smem, size = 0x4, offset = 0x4, fixed_abs, tag = 'smem constant byte address 0x4 - core index']
  #allocation1 [shape = 'u32[144,128]{1,0:T(1,128)}', space=vmem, size = 0x12000, scoped, tag = 'internal scratch']
  %s0 = inlined_call_operand.hbm [shape: f32[16,128], index: 0, kind: input, shape index: {}]
  %s1 = inlined_call_operand.hbm [shape: f32[16,26], index: 1, kind: input, shape index: {}]
  %s2 = inlined_call_operand.hbm [shape: f32[8,16,16], index: 2, kind: input, shape index: {}]
  %s3 = inlined_call_operand.hbm [shape: f32[16,128], index: 3, kind: output, shape index: {}]
  %s4 = sld [smem:[#allocation0]]
  $region34: #{tpu_custom_call.1} parent=0
    _
  %s6 = ssub.s32 1, %s4
  %s7 = scalar_select 0, %s6, %s4
  $region1: #{tpu_custom_call.1} parent=0
    #allocation2 [shape = 'u8[8192]{0}', space=vmem, size = 0x2000, scoped, tag = 'input window, operand 0, single buffered']
    #allocation3 [shape = 's32[1]{0}', space=sflag, size = 0x4, scoped, tag = 'scoped memory for tpu_custom_call.1']
    #allocation4 [shape = 's32[1]{0}', space=sflag, size = 0x4, scoped, tag = 'scoped memory for tpu_custom_call.1']
    #allocation5 [shape = 'u8[8192]{0}', space=vmem, size = 0x2000, scoped, tag = 'input window, operand 1, single buffered']
    #allocation6 [shape = 's32[1]{0}', space=sflag, size = 0x4, scoped, tag = 'scoped memory for tpu_custom_call.1']
    #allocation7 [shape = 'u8[65536]{0}', space=vmem, size = 0x10000, scoped, tag = 'input window, operand 2, single buffered']
    #allocation8 [shape = 'u8[8192]{0}', space=vmem, size = 0x2000, scoped, tag = 'output window, operand 0, single buffered']
    %8 = vsyncpa [#allocation3], 0
    %9 = vsyncpa [#allocation6], 0
    %10 = vsyncpa [#allocation4], 0
    // Predicated region
    $region2: #{tpu_custom_call.1} parent=1 // pred_check
      _
    $region3: #{tpu_custom_call.1} parent=1 // pred_check_branch
      %12 = sbr.rel (0) target = $region5
    $region4: #{tpu_custom_call.1} parent=1 // pred_region
      %s14 = ssub.s32 256, 256
      %15 = vsyncadd [#allocation3], %s14
      %s16 = sshll.u32 [#allocation2], 4
      %s17 = int_to_ptr.vmem [resolvable:$true] %s16
      %22 = dma.hbm_to_vmem [thread:$0]  %s0, 256, %s17, [#allocation3], 128, 128, 8
    $region5: #{tpu_custom_call.1} parent=1 // pred_fallthru
      _
    // Predicated region
    $region6: #{tpu_custom_call.1} parent=1 // pred_check
      _
    $region7: #{tpu_custom_call.1} parent=1 // pred_check_branch
      %24 = sbr.rel (0) target = $region9
    $region8: #{tpu_custom_call.1} parent=1 // pred_region
      %s26 = ssub.s32 256, 256
      %27 = vsyncadd [#allocation6], %s26
      %s28 = sshll.u32 [#allocation5], 4
      %s29 = int_to_ptr.vmem [resolvable:$true] %s28
      %34 = dma.hbm_to_vmem [thread:$0]  %s1, 256, %s29, [#allocation6], 128, 128, 8
    $region9: #{tpu_custom_call.1} parent=1 // pred_fallthru
      _
    // Predicated region
    $region10: #{tpu_custom_call.1} parent=1 // pred_check
      _
    $region11: #{tpu_custom_call.1} parent=1 // pred_check_branch
      %36 = sbr.rel (0) target = $region13
    $region12: #{tpu_custom_call.1} parent=1 // pred_region
      %s38 = ssub.s32 2048, 2048
      %39 = vsyncadd [#allocation6], %s38
      %s40 = sshll.u32 [#allocation7], 4
      %s41 = int_to_ptr.vmem [resolvable:$true] %s40
      %46 = dma.hbm_to_vmem [thread:$0]  %s2, 2048, %s41, [#allocation6], 128, 128, 8
    $region13: #{tpu_custom_call.1} parent=1 // pred_fallthru
      _
    // Predicated region
    $region14: #{tpu_custom_call.1} parent=1 // pred_check
      _
    $region15: #{tpu_custom_call.1} parent=1 // pred_check_branch
      %48 = sbr.rel (0) target = $region17
    $region16: #{tpu_custom_call.1} parent=1 // pred_region
      %49 = dma.done [#allocation3], 256
    $region17: #{tpu_custom_call.1} parent=1 // pred_fallthru
      _
    // Predicated region
    $region18: #{tpu_custom_call.1} parent=1 // pred_check
      _
    $region19: #{tpu_custom_call.1} parent=1 // pred_check_branch
      %51 = sbr.rel (0) target = $region21
    $region20: #{tpu_custom_call.1} parent=1 // pred_region
      %52 = dma.done [#allocation6], 256
    $region21: #{tpu_custom_call.1} parent=1 // pred_fallthru
      _
    // Predicated region
    $region22: #{tpu_custom_call.1} parent=1 // pred_check
      _
    $region23: #{tpu_custom_call.1} parent=1 // pred_check_branch
      %54 = sbr.rel (0) target = $region25
    $region24: #{tpu_custom_call.1} parent=1 // pred_region
      %55 = dma.done [#allocation6], 2048
    $region25: #{tpu_custom_call.1} parent=1 // pred_fallthru
      _
    %v56 = vld [vmem:[#allocation2] sm:$0xff]
    %v57 = vld [vmem:[#allocation2 + $0x8] sm:$0xff]
    %v58 = vld [vmem:[#allocation5] sm:$0xff]
    %v59 = vld [vmem:[#allocation5 + $0x8] sm:$0xff]
    %60 = vadd.xlane.f32.xlu0 %v56
    %v61 = vpop.xlane.xlu0 %60
    %62 = vadd.xlane.f32.xlu0 %v57
    %v63 = vpop.xlane.xlu0 %62
    %v64 = vmul.f32 %v56, %v56
    %v65 = vmul.f32 %v57, %v57
    %66 = vadd.xlane.f32.xlu0 %v64
    %v67 = vpop.xlane.xlu0 %66
    %68 = vadd.xlane.f32.xlu0 %v65
    %v69 = vpop.xlane.xlu0 %68
    %v70 = vmul.f32 %v61, 0.0078125
    %v71 = vmul.f32 %v63, 0.0078125
    %v72 = vmul.f32 %v67, 0.0078125
    %v73 = vmul.f32 %v69, 0.0078125
    %v74 = vmul.f32 %v70, %v70
    %v75 = vmul.f32 %v71, %v71
    %v76 = vsub.f32 %v72, %v74
    %v77 = vsub.f32 %v73, %v75
    %v78 = vmax.f32 %v76, 0.0
    %v79 = vmax.f32 %v77, 0.0
    %v80 = vadd.f32 %v78, 0.001
    %v81 = vadd.f32 %v79, 0.001
    %v82 = vrsqrt.pop %v80
    %v83 = vrsqrt.pop %v81
    %v84 = vmul.f32 %v58, %v82
    %v85 = vmul.f32 %v59, %v83
    %v86 = vmul.f32 %v70, %v84
    %v87 = vmul.f32 %v71, %v85
    %90 = vrot.lane.b32.xlu0 %v86, 1
    %v91 = vpop.permute.xlu0 %90
    %92 = vrot.lane.b32.xlu0 %v87, 1
    %v93 = vpop.permute.xlu0 %92
    %v96 = vsub.f32 %v58, %v91
    %v97 = vsub.f32 %v59, %v93
    %v98 = vmul.f32 %v84, %v61
    %v99 = vmul.f32 %v85, %v63
    %v100 = vmul.f32 %v96, 128.0
    %v101 = vmul.f32 %v97, 128.0
    %104 = vrot.lane.b32.xlu0 %v100, 127
    %v105 = vpop.permute.xlu0 %104
    %106 = vrot.lane.b32.xlu0 %v101, 127
    %v107 = vpop.permute.xlu0 %106
    %v110 = vadd.f32 %v98, %v105
    %v111 = vadd.f32 %v99, %v107
    %v112 = vmul.f32 %v84, %v84
    %v113 = vmul.f32 %v85, %v85
    %v114 = vmul.f32 %v112, %v67
    %v115 = vmul.f32 %v113, %v69
    %v116 = vmul.f32 %v84, 2.0
    %v117 = vmul.f32 %v85, 2.0
    %120 = vrot.lane.b32.xlu0 %v96, 127
    %v121 = vpop.permute.xlu0 %120
    %122 = vrot.lane.b32.xlu0 %v97, 127
    %v123 = vpop.permute.xlu0 %122
    %v126 = vmul.f32 %v116, %v121
    %v127 = vmul.f32 %v117, %v123
    %v128 = vmul.f32 %v126, %v61
    %v129 = vmul.f32 %v127, %v63
    %v130 = vadd.f32 %v114, %v128
    %v131 = vadd.f32 %v115, %v129
    %v132 = vmul.f32 %v100, %v96
    %v133 = vmul.f32 %v101, %v97
    %136 = vrot.lane.b32.xlu0 %v132, 127
    %v137 = vpop.permute.xlu0 %136
    %138 = vrot.lane.b32.xlu0 %v133, 127
    %v139 = vpop.permute.xlu0 %138
    %v142 = vadd.f32 %v130, %v137
    %v143 = vadd.f32 %v131, %v139
    %v144 = vrcp.pop 128.0
    %v145 = vmul.f32 %v110, %v144
    %v146 = vmul.f32 %v111, %v144
    %v147 = vmul.f32 %v142, %v144
    %v148 = vmul.f32 %v143, %v144
    %v149 = vmul.f32 %v145, %v145
    %v150 = vmul.f32 %v146, %v146
    %v151 = vsub.f32 %v147, %v149
    %v152 = vsub.f32 %v148, %v150
    %v153 = vmax.f32 %v151, 0.0
    %v154 = vmax.f32 %v152, 0.0
    %v155 = vadd.f32 %v153, 1e-05
    %v156 = vadd.f32 %v154, 1e-05
    %v157 = vrsqrt.pop %v155
    %v158 = vrsqrt.pop %v156
    %161 = vrot.lane.b32.xlu0 %v157, 2
    %v162 = vpop.permute.xlu0 %161
    %163 = vrot.lane.b32.xlu0 %v158, 2
    %v164 = vpop.permute.xlu0 %163
    %v167 = vmul.f32 %v58, %v162
    %v168 = vmul.f32 %v59, %v164
    %171 = vrot.lane.b32.xlu0 %v167, 126
    %v172 = vpop.permute.xlu0 %171
    %173 = vrot.lane.b32.xlu0 %v168, 126
    %v174 = vpop.permute.xlu0 %173
    %v177 = vmul.f32 %v145, %v172
    %v178 = vmul.f32 %v146, %v174
    %181 = vrot.lane.b32.xlu0 %v177, 3
    %v182 = vpop.permute.xlu0 %181
    %183 = vrot.lane.b32.xlu0 %v178, 3
    %v184 = vpop.permute.xlu0 %183
    %v187 = vsub.f32 %v58, %v182
    %v188 = vsub.f32 %v59, %v184
    %v189 = vmul.f32 %v84, %v172
    %v190 = vmul.f32 %v85, %v174
    %192 = vset.pattern.permute.xlu0 0
    %193 = vperm.xlu0 %192, %v189
    %v194 = vpop.permute.xlu0 %193
    %197 = vset.pattern.permute.xlu0 0
    %198 = vperm.xlu0 %197, %v190
    %v199 = vpop.permute.xlu0 %198
    %v201 = vmul.f32 %v56, %v194
    %v202 = vmul.f32 %v57, %v199
    %203 = vrot.lane.b32.xlu0 %v167, 127
    %v204 = vpop.permute.xlu0 %203
    %205 = vrot.lane.b32.xlu0 %v168, 127
    %v206 = vpop.permute.xlu0 %205
    %v209 = vmul.f32 %v96, %v204
    %v210 = vmul.f32 %v97, %v206
    %213 = vrot.lane.b32.xlu0 %v187, 126
    %v214 = vpop.permute.xlu0 %213
    %215 = vrot.lane.b32.xlu0 %v188, 126
    %v216 = vpop.permute.xlu0 %215
    %v219 = vadd.f32 %v209, %v214
    %v220 = vadd.f32 %v210, %v216
    %222 = vset.pattern.permute.xlu0 1
    %223 = vperm.xlu0 %222, %v219
    %v224 = vpop.permute.xlu0 %223
    %227 = vset.pattern.permute.xlu0 1
    %228 = vperm.xlu0 %227, %v220
    %v229 = vpop.permute.xlu0 %228
    %v231 = vadd.f32 %v201, %v224
    %v232 = vadd.f32 %v202, %v229
    %v233 = vmax.f32 %v231, 0.0
    %v234 = vmax.f32 %v232, 0.0
    %v235 = vld [vmem:[#allocation7] sm:$0xff]
    %v236 = vld [vmem:[#allocation7 + $0x8] sm:$0xff]
    %vm237 = vcmask 130048
    %v239 = vsel %vm237, %v235, 0
    %v242 = vsel %vm237, %v236, 0
    %244 = vmatprep.subr.mxu0 0.0
    %245 = vmatpush1.msra.mxu0 %v233
    %246 = vmatprep.subr.mxu0 0.0
    %247 = vmatpush1.msra.mxu0 %v234
    %248 = vmatprep.subr.mxu0 0.0
    %249 = vmatpush1.msra.mxu0 0.0
    %250 = vmatprep.subr.mxu0 0.0
    %251 = vmatpush1.msra.mxu0 0.0
    %252 = vmatprep.subr.mxu0 0.0
    %253 = vmatpush1.msra.mxu0 0.0
    %254 = vmatprep.subr.mxu0 0.0
    %255 = vmatpush1.msra.mxu0 0.0
    %256 = vmatprep.subr.mxu0 0.0
    %257 = vmatpush1.msra.mxu0 0.0
    %258 = vmatprep.subr.mxu0 0.0
    %259 = vmatpush1.msra.mxu0 0.0
    %260 = vmatprep.subr.mxu0 0.0
    %261 = vmatpush1.msra.mxu0 0.0
    %262 = vmatprep.subr.mxu0 0.0
    %263 = vmatpush1.msra.mxu0 0.0
    %264 = vmatprep.subr.mxu0 0.0
    %265 = vmatpush1.msra.mxu0 0.0
    %266 = vmatprep.subr.mxu0 0.0
    %267 = vmatpush1.msra.mxu0 0.0
    %268 = vmatprep.subr.mxu0 0.0
    %269 = vmatpush1.msra.mxu0 0.0
    %270 = vmatprep.subr.mxu0 0.0
    %271 = vmatpush1.msra.mxu0 0.0
    %272 = vmatprep.subr.mxu0 0.0
    %273 = vmatpush1.msra.mxu0 0.0
    %274 = vmatprep.subr.mxu0 0.0
    %275 = vmatpush1.msra.mxu0 0.0
    %276 = vmatprep.subr.mxu0 0.0
    %277 = vmatpush1.msra.mxu0 0.0
    %278 = vmatprep.subr.mxu0 0.0
    %279 = vmatpush1.msra.mxu0 0.0
    %280 = vmatprep.subr.mxu0 0.0
    %281 = vmatpush1.msra.mxu0 0.0
    %282 = vmatprep.subr.mxu0 0.0
    %283 = vmatpush1.msra.mxu0 0.0
    %284 = vmatprep.subr.mxu0 0.0
    %285 = vmatpush1.msra.mxu0 0.0
    %286 = vmatprep.subr.mxu0 0.0
    %287 = vmatpush1.msra.mxu0 0.0
    %288 = vmatprep.subr.mxu0 0.0
    %289 = vmatpush1.msra.mxu0 0.0
    %290 = vmatprep.subr.mxu0 0.0
    %291 = vmatpush1.msra.mxu0 0.0
    %292 = vmatprep.subr.mxu0 0.0
    %293 = vmatpush1.msra.mxu0 0.0
    %294 = vmatprep.subr.mxu0 0.0
    %295 = vmatpush1.msra.mxu0 0.0
    %296 = vmatprep.subr.mxu0 0.0
    %297 = vmatpush1.msra.mxu0 0.0
    %298 = vmatprep.subr.mxu0 0.0
    %299 = vmatpush1.msra.mxu0 0.0
    %300 = vmatprep.subr.mxu0 0.0
    %301 = vmatpush1.msra.mxu0 0.0
    %302 = vmatprep.subr.mxu0 0.0
    %303 = vmatpush1.msra.mxu0 0.0
    %304 = vmatprep.subr.mxu0 0.0
    %305 = vmatpush1.msra.mxu0 0.0
    %306 = vmatprep.subr.mxu0 0.0
    %307 = vmatpush1.msra.mxu0 0.0
    %308 = vmatprep.mubr.f32.mxu0 0.0
    %309 = vmatmul.mubr.f32.gmra.mrb[0].mxu0 %v239
    %v310 = vpop.f32.mrb[0].mxu0
    %v311 = vadd.f32 0.0, %v310
    %v312 = vpop.f32.mrb[0].mxu0
    %313 = vmatprep.mubr.f32.mxu0 0.0
    %314 = vmatmul.mubr.f32.gmra.mrb[0].mxu0 %v242
    %v315 = vpop.f32.mrb[0].mxu0
    %v316 = vadd.f32 0.0, %v315
    %v317 = vpop.f32.mrb[0].mxu0
    %318 = vdwg.mxu0
    %319 = vadd.xlane.f32.xlu0 %v311
    %v320 = vpop.xlane.xlu0 %319
    %321 = vadd.xlane.f32.xlu0 %v316
    %v322 = vpop.xlane.xlu0 %321
    %v323 = vmul.f32 %v311, %v311
    %v324 = vmul.f32 %v316, %v316
    %325 = vadd.xlane.f32.xlu0 %v323
    %v326 = vpop.xlane.xlu0 %325
    %327 = vadd.xlane.f32.xlu0 %v324
    %v328 = vpop.xlane.xlu0 %327
    %v329 = vmul.f32 %v320, 0.0078125
    %v330 = vmul.f32 %v322, 0.0078125
    %v331 = vmul.f32 %v326, 0.0078125
    %v332 = vmul.f32 %v328, 0.0078125
    %v333 = vmul.f32 %v329, %v329
    %v334 = vmul.f32 %v330, %v330
    %v335 = vsub.f32 %v331, %v333
    %v336 = vsub.f32 %v332, %v334
    %v337 = vmax.f32 %v335, 0.0
    %v338 = vmax.f32 %v336, 0.0
    %v339 = vadd.f32 %v337, 0.001
    %v340 = vadd.f32 %v338, 0.001
    %v341 = vrsqrt.pop %v339
    %v342 = vrsqrt.pop %v340
    %v343 = vmul.f32 %v58, %v341
    %v344 = vmul.f32 %v59, %v342
    %v345 = vmul.f32 %v329, %v343
    %v346 = vmul.f32 %v330, %v344
    %349 = vrot.lane.b32.xlu0 %v345, 1
    %v350 = vpop.permute.xlu0 %349
    %351 = vrot.lane.b32.xlu0 %v346, 1
    %v352 = vpop.permute.xlu0 %351
    %v355 = vsub.f32 %v58, %v350
    %v356 = vsub.f32 %v59, %v352
    %v357 = vmul.f32 %v343, %v320
    %v358 = vmul.f32 %v344, %v322
    %v359 = vmul.f32 %v355, 128.0
    %v360 = vmul.f32 %v356, 128.0
    %363 = vrot.lane.b32.xlu0 %v359, 127
    %v364 = vpop.permute.xlu0 %363
    %365 = vrot.lane.b32.xlu0 %v360, 127
    %v366 = vpop.permute.xlu0 %365
    %v369 = vadd.f32 %v357, %v364
    %v370 = vadd.f32 %v358, %v366
    %v371 = vmul.f32 %v343, %v343
    %v372 = vmul.f32 %v344, %v344
    %v373 = vmul.f32 %v371, %v326
    %v374 = vmul.f32 %v372, %v328
    %v375 = vmul.f32 %v343, 2.0
    %v376 = vmul.f32 %v344, 2.0
    %379 = vrot.lane.b32.xlu0 %v355, 127
    %v380 = vpop.permute.xlu0 %379
    %381 = vrot.lane.b32.xlu0 %v356, 127
    %v382 = vpop.permute.xlu0 %381
    %v385 = vmul.f32 %v375, %v380
    %v386 = vmul.f32 %v376, %v382
    %v387 = vmul.f32 %v385, %v320
    %v388 = vmul.f32 %v386, %v322
    %v389 = vadd.f32 %v373, %v387
    %v390 = vadd.f32 %v374, %v388
    %v391 = vmul.f32 %v359, %v355
    %v392 = vmul.f32 %v360, %v356
    %395 = vrot.lane.b32.xlu0 %v391, 127
    %v396 = vpop.permute.xlu0 %395
    %397 = vrot.lane.b32.xlu0 %v392, 127
    %v398 = vpop.permute.xlu0 %397
    %v401 = vadd.f32 %v389, %v396
    %v402 = vadd.f32 %v390, %v398
    %v403 = vmul.f32 %v369, %v144
    %v404 = vmul.f32 %v370, %v144
    %v405 = vmul.f32 %v401, %v144
    %v406 = vmul.f32 %v402, %v144
    %v407 = vmul.f32 %v403, %v403
    %v408 = vmul.f32 %v404, %v404
    %v409 = vsub.f32 %v405, %v407
    %v410 = vsub.f32 %v406, %v408
    %v411 = vmax.f32 %v409, 0.0
    %v412 = vmax.f32 %v410, 0.0
    %v413 = vadd.f32 %v411, 1e-05
    %v414 = vadd.f32 %v412, 1e-05
    %v415 = vrsqrt.pop %v413
    %v416 = vrsqrt.pop %v414
    %419 = vrot.lane.b32.xlu0 %v415, 2
    %v420 = vpop.permute.xlu0 %419
    %421 = vrot.lane.b32.xlu0 %v416, 2
    %v422 = vpop.permute.xlu0 %421
    %v425 = vmul.f32 %v58, %v420
    %v426 = vmul.f32 %v59, %v422
    %429 = vrot.lane.b32.xlu0 %v425, 126
    %v430 = vpop.permute.xlu0 %429
    %431 = vrot.lane.b32.xlu0 %v426, 126
    %v432 = vpop.permute.xlu0 %431
    %v435 = vmul.f32 %v403, %v430
    %v436 = vmul.f32 %v404, %v432
    %439 = vrot.lane.b32.xlu0 %v435, 3
    %v440 = vpop.permute.xlu0 %439
    %441 = vrot.lane.b32.xlu0 %v436, 3
    %v442 = vpop.permute.xlu0 %441
    %v445 = vsub.f32 %v58, %v440
    %v446 = vsub.f32 %v59, %v442
    %v447 = vmul.f32 %v343, %v430
    %v448 = vmul.f32 %v344, %v432
    %450 = vset.pattern.permute.xlu0 4
    %451 = vperm.xlu0 %450, %v447
    %v452 = vpop.permute.xlu0 %451
    %455 = vset.pattern.permute.xlu0 4
    %456 = vperm.xlu0 %455, %v448
    %v457 = vpop.permute.xlu0 %456
    %v459 = vmul.f32 %v311, %v452
    %v460 = vmul.f32 %v316, %v457
    %461 = vrot.lane.b32.xlu0 %v425, 127
    %v462 = vpop.permute.xlu0 %461
    %463 = vrot.lane.b32.xlu0 %v426, 127
    %v464 = vpop.permute.xlu0 %463
    %v467 = vmul.f32 %v355, %v462
    %v468 = vmul.f32 %v356, %v464
    %471 = vrot.lane.b32.xlu0 %v445, 126
    %v472 = vpop.permute.xlu0 %471
    %473 = vrot.lane.b32.xlu0 %v446, 126
    %v474 = vpop.permute.xlu0 %473
    %v477 = vadd.f32 %v467, %v472
    %v478 = vadd.f32 %v468, %v474
    %480 = vset.pattern.permute.xlu0 5
    %481 = vperm.xlu0 %480, %v477
    %v482 = vpop.permute.xlu0 %481
    %485 = vset.pattern.permute.xlu0 5
    %486 = vperm.xlu0 %485, %v478
    %v487 = vpop.permute.xlu0 %486
    %v489 = vadd.f32 %v459, %v482
    %v490 = vadd.f32 %v460, %v487
    %v491 = vmax.f32 %v489, 0.0
    %v492 = vmax.f32 %v490, 0.0
    %s493 = scalar_lea.vmem [#allocation7], 16
    %v494 = vld [vmem:[%s493] sm:$0xff]
    %v495 = vld [vmem:[%s493 + $0x8] sm:$0xff]
    %v497 = vsel %vm237, %v494, 0
    %v500 = vsel %vm237, %v495, 0
    %502 = vmatprep.subr.mxu0 0.0
    %503 = vmatpush1.msra.mxu0 %v491
    %504 = vmatprep.subr.mxu0 0.0
    %505 = vmatpush1.msra.mxu0 %v492
    %506 = vmatprep.subr.mxu0 0.0
    %507 = vmatpush1.msra.mxu0 0.0
    %508 = vmatprep.subr.mxu0 0.0
    %509 = vmatpush1.msra.mxu0 0.0
    %510 = vmatprep.subr.mxu0 0.0
    %511 = vmatpush1.msra.mxu0 0.0
    %512 = vmatprep.subr.mxu0 0.0
    %513 = vmatpush1.msra.mxu0 0.0
    %514 = vmatprep.subr.mxu0 0.0
    %515 = vmatpush1.msra.mxu0 0.0
    %516 = vmatprep.subr.mxu0 0.0
    %517 = vmatpush1.msra.mxu0 0.0
    %518 = vmatprep.subr.mxu0 0.0
    %519 = vmatpush1.msra.mxu0 0.0
    %520 = vmatprep.subr.mxu0 0.0
    %521 = vmatpush1.msra.mxu0 0.0
    %522 = vmatprep.subr.mxu0 0.0
    %523 = vmatpush1.msra.mxu0 0.0
    %524 = vmatprep.subr.mxu0 0.0
    %525 = vmatpush1.msra.mxu0 0.0
    %526 = vmatprep.subr.mxu0 0.0
    %527 = vmatpush1.msra.mxu0 0.0
    %528 = vmatprep.subr.mxu0 0.0
    %529 = vmatpush1.msra.mxu0 0.0
    %530 = vmatprep.subr.mxu0 0.0
    %531 = vmatpush1.msra.mxu0 0.0
    %532 = vmatprep.subr.mxu0 0.0
    %533 = vmatpush1.msra.mxu0 0.0
    %534 = vmatprep.subr.mxu0 0.0
    %535 = vmatpush1.msra.mxu0 0.0
    %536 = vmatprep.subr.mxu0 0.0
    %537 = vmatpush1.msra.mxu0 0.0
    %538 = vmatprep.subr.mxu0 0.0
    %539 = vmatpush1.msra.mxu0 0.0
    %540 = vmatprep.subr.mxu0 0.0
    %541 = vmatpush1.msra.mxu0 0.0
    %542 = vmatprep.subr.mxu0 0.0
    %543 = vmatpush1.msra.mxu0 0.0
    %544 = vmatprep.subr.mxu0 0.0
    %545 = vmatpush1.msra.mxu0 0.0
    %546 = vmatprep.subr.mxu0 0.0
    %547 = vmatpush1.msra.mxu0 0.0
    %548 = vmatprep.subr.mxu0 0.0
    %549 = vmatpush1.msra.mxu0 0.0
    %550 = vmatprep.subr.mxu0 0.0
    %551 = vmatpush1.msra.mxu0 0.0
    %552 = vmatprep.subr.mxu0 0.0
    %553 = vmatpush1.msra.mxu0 0.0
    %554 = vmatprep.subr.mxu0 0.0
    %555 = vmatpush1.msra.mxu0 0.0
    %556 = vmatprep.subr.mxu0 0.0
    %557 = vmatpush1.msra.mxu0 0.0
    %558 = vmatprep.subr.mxu0 0.0
    %559 = vmatpush1.msra.mxu0 0.0
    %560 = vmatprep.subr.mxu0 0.0
    %561 = vmatpush1.msra.mxu0 0.0
    %562 = vmatprep.subr.mxu0 0.0
    %563 = vmatpush1.msra.mxu0 0.0
    %564 = vmatprep.subr.mxu0 0.0
    %565 = vmatpush1.msra.mxu0 0.0
    %566 = vmatprep.mubr.f32.mxu0 0.0
    %567 = vmatmul.mubr.f32.gmra.mrb[0].mxu0 %v497
    %v568 = vpop.f32.mrb[0].mxu0
    %v569 = vadd.f32 0.0, %v568
    %v570 = vpop.f32.mrb[0].mxu0
    %571 = vmatprep.mubr.f32.mxu0 0.0
    %572 = vmatmul.mubr.f32.gmra.mrb[0].mxu0 %v500
    %v573 = vpop.f32.mrb[0].mxu0
    %v574 = vadd.f32 0.0, %v573
    %v575 = vpop.f32.mrb[0].mxu0
    %576 = vdwg.mxu0
    %577 = vadd.xlane.f32.xlu0 %v569
    %v578 = vpop.xlane.xlu0 %577
    %579 = vadd.xlane.f32.xlu0 %v574
    %v580 = vpop.xlane.xlu0 %579
    %v581 = vmul.f32 %v569, %v569
    %v582 = vmul.f32 %v574, %v574
    %583 = vadd.xlane.f32.xlu0 %v581
    %v584 = vpop.xlane.xlu0 %583
    %585 = vadd.xlane.f32.xlu0 %v582
    %v586 = vpop.xlane.xlu0 %585
    %v587 = vmul.f32 %v578, 0.0078125
    %v588 = vmul.f32 %v580, 0.0078125
    %v589 = vmul.f32 %v584, 0.0078125
    %v590 = vmul.f32 %v586, 0.0078125
    %v591 = vmul.f32 %v587, %v587
    %v592 = vmul.f32 %v588, %v588
    %v593 = vsub.f32 %v589, %v591
    %v594 = vsub.f32 %v590, %v592
    %v595 = vmax.f32 %v593, 0.0
    %v596 = vmax.f32 %v594, 0.0
    %v597 = vadd.f32 %v595, 0.001
    %v598 = vadd.f32 %v596, 0.001
    %v599 = vrsqrt.pop %v597
    %v600 = vrsqrt.pop %v598
    %v601 = vmul.f32 %v58, %v599
    %v602 = vmul.f32 %v59, %v600
    %v603 = vmul.f32 %v587, %v601
    %v604 = vmul.f32 %v588, %v602
    %607 = vrot.lane.b32.xlu0 %v603, 1
    %v608 = vpop.permute.xlu0 %607
    %609 = vrot.lane.b32.xlu0 %v604, 1
    %v610 = vpop.permute.xlu0 %609
    %v613 = vsub.f32 %v58, %v608
    %v614 = vsub.f32 %v59, %v610
    %v615 = vmul.f32 %v601, %v578
    %v616 = vmul.f32 %v602, %v580
    %v617 = vmul.f32 %v613, 128.0
    %v618 = vmul.f32 %v614, 128.0
    %621 = vrot.lane.b32.xlu0 %v617, 127
    %v622 = vpop.permute.xlu0 %621
    %623 = vrot.lane.b32.xlu0 %v618, 127
    %v624 = vpop.permute.xlu0 %623
    %v627 = vadd.f32 %v615, %v622
    %v628 = vadd.f32 %v616, %v624
    %v629 = vmul.f32 %v601, %v601
    %v630 = vmul.f32 %v602, %v602
    %v631 = vmul.f32 %v629, %v584
    %v632 = vmul.f32 %v630, %v586
    %v633 = vmul.f32 %v601, 2.0
    %v634 = vmul.f32 %v602, 2.0
    %637 = vrot.lane.b32.xlu0 %v613, 127
    %v638 = vpop.permute.xlu0 %637
    %639 = vrot.lane.b32.xlu0 %v614, 127
    %v640 = vpop.permute.xlu0 %639
    %v643 = vmul.f32 %v633, %v638
    %v644 = vmul.f32 %v634, %v640
    %v645 = vmul.f32 %v643, %v578
    %v646 = vmul.f32 %v644, %v580
    %v647 = vadd.f32 %v631, %v645
    %v648 = vadd.f32 %v632, %v646
    %v649 = vmul.f32 %v617, %v613
    %v650 = vmul.f32 %v618, %v614
    %653 = vrot.lane.b32.xlu0 %v649, 127
    %v654 = vpop.permute.xlu0 %653
    %655 = vrot.lane.b32.xlu0 %v650, 127
    %v656 = vpop.permute.xlu0 %655
    %v659 = vadd.f32 %v647, %v654
    %v660 = vadd.f32 %v648, %v656
    %v661 = vmul.f32 %v627, %v144
    %v662 = vmul.f32 %v628, %v144
    %v663 = vmul.f32 %v659, %v144
    %v664 = vmul.f32 %v660, %v144
    %v665 = vmul.f32 %v661, %v661
    %v666 = vmul.f32 %v662, %v662
    %v667 = vsub.f32 %v663, %v665
    %v668 = vsub.f32 %v664, %v666
    %v669 = vmax.f32 %v667, 0.0
    %v670 = vmax.f32 %v668, 0.0
    %v671 = vadd.f32 %v669, 1e-05
    %v672 = vadd.f32 %v670, 1e-05
    %v673 = vrsqrt.pop %v671
    %v674 = vrsqrt.pop %v672
    %677 = vrot.lane.b32.xlu0 %v673, 2
    %v678 = vpop.permute.xlu0 %677
    %679 = vrot.lane.b32.xlu0 %v674, 2
    %v680 = vpop.permute.xlu0 %679
    %v683 = vmul.f32 %v58, %v678
    %v684 = vmul.f32 %v59, %v680
    %687 = vrot.lane.b32.xlu0 %v683, 126
    %v688 = vpop.permute.xlu0 %687
    %689 = vrot.lane.b32.xlu0 %v684, 126
    %v690 = vpop.permute.xlu0 %689
    %v693 = vmul.f32 %v661, %v688
    %v694 = vmul.f32 %v662, %v690
    %697 = vrot.lane.b32.xlu0 %v693, 3
    %v698 = vpop.permute.xlu0 %697
    %699 = vrot.lane.b32.xlu0 %v694, 3
    %v700 = vpop.permute.xlu0 %699
    %v703 = vsub.f32 %v58, %v698
    %v704 = vsub.f32 %v59, %v700
    %v705 = vmul.f32 %v601, %v688
    %v706 = vmul.f32 %v602, %v690
    %708 = vset.pattern.permute.xlu0 8
    %709 = vperm.xlu0 %708, %v705
    %v710 = vpop.permute.xlu0 %709
    %713 = vset.pattern.permute.xlu0 8
    %714 = vperm.xlu0 %713, %v706
    %v715 = vpop.permute.xlu0 %714
    %v717 = vmul.f32 %v569, %v710
    %v718 = vmul.f32 %v574, %v715
    %719 = vrot.lane.b32.xlu0 %v683, 127
    %v720 = vpop.permute.xlu0 %719
    %721 = vrot.lane.b32.xlu0 %v684, 127
    %v722 = vpop.permute.xlu0 %721
    %v725 = vmul.f32 %v613, %v720
    %v726 = vmul.f32 %v614, %v722
    %729 = vrot.lane.b32.xlu0 %v703, 126
    %v730 = vpop.permute.xlu0 %729
    %731 = vrot.lane.b32.xlu0 %v704, 126
    %v732 = vpop.permute.xlu0 %731
    %v735 = vadd.f32 %v725, %v730
    %v736 = vadd.f32 %v726, %v732
    %738 = vset.pattern.permute.xlu0 9
    %739 = vperm.xlu0 %738, %v735
    %v740 = vpop.permute.xlu0 %739
    %743 = vset.pattern.permute.xlu0 9
    %744 = vperm.xlu0 %743, %v736
    %v745 = vpop.permute.xlu0 %744
    %v747 = vadd.f32 %v717, %v740
    %v748 = vadd.f32 %v718, %v745
    %s749 = scalar_lea.vmem [#allocation7], 32
    %v750 = vld [vmem:[%s749] sm:$0xff]
    %v751 = vld [vmem:[%s749 + $0x8] sm:$0xff]
    %s752 = scalar_lea.vmem [#allocation7], 48
    %v753 = vld [vmem:[%s752] sm:$0xff]
    %v754 = vld [vmem:[%s752 + $0x8] sm:$0xff]
    %v756 = vsel %vm237, %v753, 0
    %v759 = vsel %vm237, %v754, 0
    %761 = vmatprep.subr.mxu0 0.0
    %762 = vmatpush1.msra.mxu0 %v56
    %763 = vmatprep.subr.mxu0 0.0
    %764 = vmatpush1.msra.mxu0 %v57
    %765 = vmatprep.subr.mxu0 0.0
    %766 = vmatpush1.msra.mxu0 0.0
    %767 = vmatprep.subr.mxu0 0.0
    %768 = vmatpush1.msra.mxu0 0.0
    %769 = vmatprep.subr.mxu0 0.0
    %770 = vmatpush1.msra.mxu0 0.0
    %771 = vmatprep.subr.mxu0 0.0
    %772 = vmatpush1.msra.mxu0 0.0
    %773 = vmatprep.subr.mxu0 0.0
    %774 = vmatpush1.msra.mxu0 0.0
    %775 = vmatprep.subr.mxu0 0.0
    %776 = vmatpush1.msra.mxu0 0.0
    %777 = vmatprep.subr.mxu0 0.0
    %778 = vmatpush1.msra.mxu0 0.0
    %779 = vmatprep.subr.mxu0 0.0
    %780 = vmatpush1.msra.mxu0 0.0
    %781 = vmatprep.subr.mxu0 0.0
    %782 = vmatpush1.msra.mxu0 0.0
    %783 = vmatprep.subr.mxu0 0.0
    %784 = vmatpush1.msra.mxu0 0.0
    %785 = vmatprep.subr.mxu0 0.0
    %786 = vmatpush1.msra.mxu0 0.0
    %787 = vmatprep.subr.mxu0 0.0
    %788 = vmatpush1.msra.mxu0 0.0
    %789 = vmatprep.subr.mxu0 0.0
    %790 = vmatpush1.msra.mxu0 0.0
    %791 = vmatprep.subr.mxu0 0.0
    %792 = vmatpush1.msra.mxu0 0.0
    %793 = vmatprep.subr.mxu0 0.0
    %794 = vmatpush1.msra.mxu0 0.0
    %795 = vmatprep.subr.mxu0 0.0
    %796 = vmatpush1.msra.mxu0 0.0
    %797 = vmatprep.subr.mxu0 0.0
    %798 = vmatpush1.msra.mxu0 0.0
    %799 = vmatprep.subr.mxu0 0.0
    %800 = vmatpush1.msra.mxu0 0.0
    %801 = vmatprep.subr.mxu0 0.0
    %802 = vmatpush1.msra.mxu0 0.0
    %803 = vmatprep.subr.mxu0 0.0
    %804 = vmatpush1.msra.mxu0 0.0
    %805 = vmatprep.subr.mxu0 0.0
    %806 = vmatpush1.msra.mxu0 0.0
    %807 = vmatprep.subr.mxu0 0.0
    %808 = vmatpush1.msra.mxu0 0.0
    %809 = vmatprep.subr.mxu0 0.0
    %810 = vmatpush1.msra.mxu0 0.0
    %811 = vmatprep.subr.mxu0 0.0
    %812 = vmatpush1.msra.mxu0 0.0
    %813 = vmatprep.subr.mxu0 0.0
    %814 = vmatpush1.msra.mxu0 0.0
    %815 = vmatprep.subr.mxu0 0.0
    %816 = vmatpush1.msra.mxu0 0.0
    %817 = vmatprep.subr.mxu0 0.0
    %818 = vmatpush1.msra.mxu0 0.0
    %819 = vmatprep.subr.mxu0 0.0
    %820 = vmatpush1.msra.mxu0 0.0
    %821 = vmatprep.subr.mxu0 0.0
    %822 = vmatpush1.msra.mxu0 0.0
    %823 = vmatprep.subr.mxu0 0.0
    %824 = vmatpush1.msra.mxu0 0.0
    %825 = vmatprep.mubr.f32.mxu0 0.0
    %826 = vmatmul.mubr.f32.gmra.mrb[0].mxu0 %v756
    %v827 = vpop.f32.mrb[0].mxu0
    %v828 = vadd.f32 0.0, %v827
    %v829 = vpop.f32.mrb[0].mxu0
    %830 = vmatprep.mubr.f32.mxu0 0.0
    %831 = vmatmul.mubr.f32.gmra.mrb[0].mxu0 %v759
    %v832 = vpop.f32.mrb[0].mxu0
    %v833 = vadd.f32 0.0, %v832
    %v834 = vpop.f32.mrb[0].mxu0
    %835 = vdwg.mxu0
    %v837 = vsel %vm237, %v750, 0
    %v840 = vsel %vm237, %v751, 0
    %842 = vmatprep.subr.mxu0 0.0
    %843 = vmatpush1.msra.mxu0 %v747
    %844 = vmatprep.subr.mxu0 0.0
    %845 = vmatpush1.msra.mxu0 %v748
    %846 = vmatprep.subr.mxu0 0.0
    %847 = vmatpush1.msra.mxu0 0.0
    %848 = vmatprep.subr.mxu0 0.0
    %849 = vmatpush1.msra.mxu0 0.0
    %850 = vmatprep.subr.mxu0 0.0
    %851 = vmatpush1.msra.mxu0 0.0
    %852 = vmatprep.subr.mxu0 0.0
    %853 = vmatpush1.msra.mxu0 0.0
    %854 = vmatprep.subr.mxu0 0.0
    %855 = vmatpush1.msra.mxu0 0.0
    %856 = vmatprep.subr.mxu0 0.0
    %857 = vmatpush1.msra.mxu0 0.0
    %858 = vmatprep.subr.mxu0 0.0
    %859 = vmatpush1.msra.mxu0 0.0
    %860 = vmatprep.subr.mxu0 0.0
    %861 = vmatpush1.msra.mxu0 0.0
    %862 = vmatprep.subr.mxu0 0.0
    %863 = vmatpush1.msra.mxu0 0.0
    %864 = vmatprep.subr.mxu0 0.0
    %865 = vmatpush1.msra.mxu0 0.0
    %866 = vmatprep.subr.mxu0 0.0
    %867 = vmatpush1.msra.mxu0 0.0
    %868 = vmatprep.subr.mxu0 0.0
    %869 = vmatpush1.msra.mxu0 0.0
    %870 = vmatprep.subr.mxu0 0.0
    %871 = vmatpush1.msra.mxu0 0.0
    %872 = vmatprep.subr.mxu0 0.0
    %873 = vmatpush1.msra.mxu0 0.0
    %874 = vmatprep.subr.mxu0 0.0
    %875 = vmatpush1.msra.mxu0 0.0
    %876 = vmatprep.subr.mxu0 0.0
    %877 = vmatpush1.msra.mxu0 0.0
    %878 = vmatprep.subr.mxu0 0.0
    %879 = vmatpush1.msra.mxu0 0.0
    %880 = vmatprep.subr.mxu0 0.0
    %881 = vmatpush1.msra.mxu0 0.0
    %882 = vmatprep.subr.mxu0 0.0
    %883 = vmatpush1.msra.mxu0 0.0
    %884 = vmatprep.subr.mxu0 0.0
    %885 = vmatpush1.msra.mxu0 0.0
    %886 = vmatprep.subr.mxu0 0.0
    %887 = vmatpush1.msra.mxu0 0.0
    %888 = vmatprep.subr.mxu0 0.0
    %889 = vmatpush1.msra.mxu0 0.0
    %890 = vmatprep.subr.mxu0 0.0
    %891 = vmatpush1.msra.mxu0 0.0
    %892 = vmatprep.subr.mxu0 0.0
    %893 = vmatpush1.msra.mxu0 0.0
    %894 = vmatprep.subr.mxu0 0.0
    %895 = vmatpush1.msra.mxu0 0.0
    %896 = vmatprep.subr.mxu0 0.0
    %897 = vmatpush1.msra.mxu0 0.0
    %898 = vmatprep.subr.mxu0 0.0
    %899 = vmatpush1.msra.mxu0 0.0
    %900 = vmatprep.subr.mxu0 0.0
    %901 = vmatpush1.msra.mxu0 0.0
    %902 = vmatprep.subr.mxu0 0.0
    %903 = vmatpush1.msra.mxu0 0.0
    %904 = vmatprep.subr.mxu0 0.0
    %905 = vmatpush1.msra.mxu0 0.0
    %906 = vmatprep.mubr.f32.mxu0 0.0
    %907 = vmatmul.mubr.f32.gmra.mrb[0].mxu0 %v837
    %v908 = vpop.f32.mrb[0].mxu0
    %v909 = vadd.f32 %v828, %v908
    %v910 = vpop.f32.mrb[0].mxu0
    %911 = vmatprep.mubr.f32.mxu0 0.0
    %912 = vmatmul.mubr.f32.gmra.mrb[0].mxu0 %v840
    %v913 = vpop.f32.mrb[0].mxu0
    %v914 = vadd.f32 %v833, %v913
    %v915 = vpop.f32.mrb[0].mxu0
    %916 = vdwg.mxu0
    %918 = vset.pattern.permute.xlu0 12
    %919 = vperm.xlu0 %918, %v58
    %v920 = vpop.permute.xlu0 %919
    %923 = vset.pattern.permute.xlu0 12
    %924 = vperm.xlu0 %923, %v59
    %v925 = vpop.permute.xlu0 %924
    %v927 = vadd.f32 %v909, %v920
    %v928 = vadd.f32 %v914, %v925
    %929 = vadd.xlane.f32.xlu0 %v927
    %v930 = vpop.xlane.xlu0 %929
    %931 = vadd.xlane.f32.xlu0 %v928
    %v932 = vpop.xlane.xlu0 %931
    %v933 = vmul.f32 %v927, %v927
    %v934 = vmul.f32 %v928, %v928
    %935 = vadd.xlane.f32.xlu0 %v933
    %v936 = vpop.xlane.xlu0 %935
    %937 = vadd.xlane.f32.xlu0 %v934
    %v938 = vpop.xlane.xlu0 %937
    %v939 = vmul.f32 %v930, 0.0078125
    %v940 = vmul.f32 %v932, 0.0078125
    %v941 = vmul.f32 %v936, 0.0078125
    %v942 = vmul.f32 %v938, 0.0078125
    %v943 = vmul.f32 %v939, %v939
    %v944 = vmul.f32 %v940, %v940
    %v945 = vsub.f32 %v941, %v943
    %v946 = vsub.f32 %v942, %v944
    %v947 = vmax.f32 %v945, 0.0
    %v948 = vmax.f32 %v946, 0.0
    %v949 = vadd.f32 %v947, 0.001
    %v950 = vadd.f32 %v948, 0.001
    %v951 = vrsqrt.pop %v949
    %v952 = vrsqrt.pop %v950
    %v953 = vmul.f32 %v58, %v951
    %v954 = vmul.f32 %v59, %v952
    %v955 = vmul.f32 %v939, %v953
    %v956 = vmul.f32 %v940, %v954
    %959 = vrot.lane.b32.xlu0 %v955, 1
    %v960 = vpop.permute.xlu0 %959
    %961 = vrot.lane.b32.xlu0 %v956, 1
    %v962 = vpop.permute.xlu0 %961
    %v965 = vsub.f32 %v58, %v960
    %v966 = vsub.f32 %v59, %v962
    %v967 = vmul.f32 %v953, %v930
    %v968 = vmul.f32 %v954, %v932
    %v969 = vmul.f32 %v965, 128.0
    %v970 = vmul.f32 %v966, 128.0
    %973 = vrot.lane.b32.xlu0 %v969, 127
    %v974 = vpop.permute.xlu0 %973
    %975 = vrot.lane.b32.xlu0 %v970, 127
    %v976 = vpop.permute.xlu0 %975
    %v979 = vadd.f32 %v967, %v974
    %v980 = vadd.f32 %v968, %v976
    %v981 = vmul.f32 %v953, %v953
    %v982 = vmul.f32 %v954, %v954
    %v983 = vmul.f32 %v981, %v936
    %v984 = vmul.f32 %v982, %v938
    %v985 = vmul.f32 %v953, 2.0
    %v986 = vmul.f32 %v954, 2.0
    %989 = vrot.lane.b32.xlu0 %v965, 127
    %v990 = vpop.permute.xlu0 %989
    %991 = vrot.lane.b32.xlu0 %v966, 127
    %v992 = vpop.permute.xlu0 %991
    %v995 = vmul.f32 %v985, %v990
    %v996 = vmul.f32 %v986, %v992
    %v997 = vmul.f32 %v995, %v930
    %v998 = vmul.f32 %v996, %v932
    %v999 = vadd.f32 %v983, %v997
    %v1000 = vadd.f32 %v984, %v998
    %v1001 = vmul.f32 %v969, %v965
    %v1002 = vmul.f32 %v970, %v966
    %1005 = vrot.lane.b32.xlu0 %v1001, 127
    %v1006 = vpop.permute.xlu0 %1005
    %1007 = vrot.lane.b32.xlu0 %v1002, 127
    %v1008 = vpop.permute.xlu0 %1007
    %v1011 = vadd.f32 %v999, %v1006
    %v1012 = vadd.f32 %v1000, %v1008
    %v1013 = vmul.f32 %v979, %v144
    %v1014 = vmul.f32 %v980, %v144
    %v1015 = vmul.f32 %v1011, %v144
    %v1016 = vmul.f32 %v1012, %v144
    %v1017 = vmul.f32 %v1013, %v1013
    %v1018 = vmul.f32 %v1014, %v1014
    %v1019 = vsub.f32 %v1015, %v1017
    %v1020 = vsub.f32 %v1016, %v1018
    %v1021 = vmax.f32 %v1019, 0.0
    %v1022 = vmax.f32 %v1020, 0.0
    %v1023 = vadd.f32 %v1021, 1e-05
    %v1024 = vadd.f32 %v1022, 1e-05
    %v1025 = vrsqrt.pop %v1023
    %v1026 = vrsqrt.pop %v1024
    %1029 = vrot.lane.b32.xlu0 %v1025, 2
    %v1030 = vpop.permute.xlu0 %1029
    %1031 = vrot.lane.b32.xlu0 %v1026, 2
    %v1032 = vpop.permute.xlu0 %1031
    %v1035 = vmul.f32 %v58, %v1030
    %v1036 = vmul.f32 %v59, %v1032
    %1039 = vrot.lane.b32.xlu0 %v1035, 126
    %v1040 = vpop.permute.xlu0 %1039
    %1041 = vrot.lane.b32.xlu0 %v1036, 126
    %v1042 = vpop.permute.xlu0 %1041
    %v1045 = vmul.f32 %v1013, %v1040
    %v1046 = vmul.f32 %v1014, %v1042
    %1049 = vrot.lane.b32.xlu0 %v1045, 3
    %v1050 = vpop.permute.xlu0 %1049
    %1051 = vrot.lane.b32.xlu0 %v1046, 3
    %v1052 = vpop.permute.xlu0 %1051
    %v1055 = vsub.f32 %v58, %v1050
    %v1056 = vsub.f32 %v59, %v1052
    %v1057 = vmul.f32 %v953, %v1040
    %v1058 = vmul.f32 %v954, %v1042
    %1060 = vset.pattern.permute.xlu0 13
    %1061 = vperm.xlu0 %1060, %v1057
    %v1062 = vpop.permute.xlu0 %1061
    %1065 = vset.pattern.permute.xlu0 13
    %1066 = vperm.xlu0 %1065, %v1058
    %v1067 = vpop.permute.xlu0 %1066
    %v1069 = vmul.f32 %v927, %v1062
    %v1070 = vmul.f32 %v928, %v1067
    %1071 = vrot.lane.b32.xlu0 %v1035, 127
    %v1072 = vpop.permute.xlu0 %1071
    %1073 = vrot.lane.b32.xlu0 %v1036, 127
    %v1074 = vpop.permute.xlu0 %1073
    %v1077 = vmul.f32 %v965, %v1072
    %v1078 = vmul.f32 %v966, %v1074
    %1081 = vrot.lane.b32.xlu0 %v1055, 126
    %v1082 = vpop.permute.xlu0 %1081
    %1083 = vrot.lane.b32.xlu0 %v1056, 126
    %v1084 = vpop.permute.xlu0 %1083
    %v1087 = vadd.f32 %v1077, %v1082
    %v1088 = vadd.f32 %v1078, %v1084
    %1090 = vset.pattern.permute.xlu0 14
    %1091 = vperm.xlu0 %1090, %v1087
    %v1092 = vpop.permute.xlu0 %1091
    %1095 = vset.pattern.permute.xlu0 14
    %1096 = vperm.xlu0 %1095, %v1088
    %v1097 = vpop.permute.xlu0 %1096
    %v1099 = vadd.f32 %v1069, %v1092
    %v1100 = vadd.f32 %v1070, %v1097
    %v1101 = vmax.f32 %v1099, 0.0
    %v1102 = vmax.f32 %v1100, 0.0
    %s1103 = scalar_lea.vmem [#allocation7], 64
    %v1104 = vld [vmem:[%s1103] sm:$0xff]
    %v1105 = vld [vmem:[%s1103 + $0x8] sm:$0xff]
    %v1107 = vsel %vm237, %v1104, 0
    %v1110 = vsel %vm237, %v1105, 0
    %1112 = vmatprep.subr.mxu0 0.0
    %1113 = vmatpush1.msra.mxu0 %v1101
    %1114 = vmatprep.subr.mxu0 0.0
    %1115 = vmatpush1.msra.mxu0 %v1102
    %1116 = vmatprep.subr.mxu0 0.0
    %1117 = vmatpush1.msra.mxu0 0.0
    %1118 = vmatprep.subr.mxu0 0.0
    %1119 = vmatpush1.msra.mxu0 0.0
    %1120 = vmatprep.subr.mxu0 0.0
    %1121 = vmatpush1.msra.mxu0 0.0
    %1122 = vmatprep.subr.mxu0 0.0
    %1123 = vmatpush1.msra.mxu0 0.0
    %1124 = vmatprep.subr.mxu0 0.0
    %1125 = vmatpush1.msra.mxu0 0.0
    %1126 = vmatprep.subr.mxu0 0.0
    %1127 = vmatpush1.msra.mxu0 0.0
    %1128 = vmatprep.subr.mxu0 0.0
    %1129 = vmatpush1.msra.mxu0 0.0
    %1130 = vmatprep.subr.mxu0 0.0
    %1131 = vmatpush1.msra.mxu0 0.0
    %1132 = vmatprep.subr.mxu0 0.0
    %1133 = vmatpush1.msra.mxu0 0.0
    %1134 = vmatprep.subr.mxu0 0.0
    %1135 = vmatpush1.msra.mxu0 0.0
    %1136 = vmatprep.subr.mxu0 0.0
    %1137 = vmatpush1.msra.mxu0 0.0
    %1138 = vmatprep.subr.mxu0 0.0
    %1139 = vmatpush1.msra.mxu0 0.0
    %1140 = vmatprep.subr.mxu0 0.0
    %1141 = vmatpush1.msra.mxu0 0.0
    %1142 = vmatprep.subr.mxu0 0.0
    %1143 = vmatpush1.msra.mxu0 0.0
    %1144 = vmatprep.subr.mxu0 0.0
    %1145 = vmatpush1.msra.mxu0 0.0
    %1146 = vmatprep.subr.mxu0 0.0
    %1147 = vmatpush1.msra.mxu0 0.0
    %1148 = vmatprep.subr.mxu0 0.0
    %1149 = vmatpush1.msra.mxu0 0.0
    %1150 = vmatprep.subr.mxu0 0.0
    %1151 = vmatpush1.msra.mxu0 0.0
    %1152 = vmatprep.subr.mxu0 0.0
    %1153 = vmatpush1.msra.mxu0 0.0
    %1154 = vmatprep.subr.mxu0 0.0
    %1155 = vmatpush1.msra.mxu0 0.0
    %1156 = vmatprep.subr.mxu0 0.0
    %1157 = vmatpush1.msra.mxu0 0.0
    %1158 = vmatprep.subr.mxu0 0.0
    %1159 = vmatpush1.msra.mxu0 0.0
    %1160 = vmatprep.subr.mxu0 0.0
    %1161 = vmatpush1.msra.mxu0 0.0
    %1162 = vmatprep.subr.mxu0 0.0
    %1163 = vmatpush1.msra.mxu0 0.0
    %1164 = vmatprep.subr.mxu0 0.0
    %1165 = vmatpush1.msra.mxu0 0.0
    %1166 = vmatprep.subr.mxu0 0.0
    %1167 = vmatpush1.msra.mxu0 0.0
    %1168 = vmatprep.subr.mxu0 0.0
    %1169 = vmatpush1.msra.mxu0 0.0
    %1170 = vmatprep.subr.mxu0 0.0
    %1171 = vmatpush1.msra.mxu0 0.0
    %1172 = vmatprep.subr.mxu0 0.0
    %1173 = vmatpush1.msra.mxu0 0.0
    %1174 = vmatprep.subr.mxu0 0.0
    %1175 = vmatpush1.msra.mxu0 0.0
    %1176 = vmatprep.mubr.f32.mxu0 0.0
    %1177 = vmatmul.mubr.f32.gmra.mrb[0].mxu0 %v1107
    %v1178 = vpop.f32.mrb[0].mxu0
    %v1179 = vadd.f32 0.0, %v1178
    %v1180 = vpop.f32.mrb[0].mxu0
    %1181 = vmatprep.mubr.f32.mxu0 0.0
    %1182 = vmatmul.mubr.f32.gmra.mrb[0].mxu0 %v1110
    %v1183 = vpop.f32.mrb[0].mxu0
    %v1184 = vadd.f32 0.0, %v1183
    %v1185 = vpop.f32.mrb[0].mxu0
    %1186 = vdwg.mxu0
    %1187 = vadd.xlane.f32.xlu0 %v1179
    %v1188 = vpop.xlane.xlu0 %1187
    %1189 = vadd.xlane.f32.xlu0 %v1184
    %v1190 = vpop.xlane.xlu0 %1189
    %v1191 = vmul.f32 %v1179, %v1179
    %v1192 = vmul.f32 %v1184, %v1184
    %1193 = vadd.xlane.f32.xlu0 %v1191
    %v1194 = vpop.xlane.xlu0 %1193
    %1195 = vadd.xlane.f32.xlu0 %v1192
    %v1196 = vpop.xlane.xlu0 %1195
    %v1197 = vmul.f32 %v1188, 0.0078125
    %v1198 = vmul.f32 %v1190, 0.0078125
    %v1199 = vmul.f32 %v1194, 0.0078125
    %v1200 = vmul.f32 %v1196, 0.0078125
    %v1201 = vmul.f32 %v1197, %v1197
    %v1202 = vmul.f32 %v1198, %v1198
    %v1203 = vsub.f32 %v1199, %v1201
    %v1204 = vsub.f32 %v1200, %v1202
    %v1205 = vmax.f32 %v1203, 0.0
    %v1206 = vmax.f32 %v1204, 0.0
    %v1207 = vadd.f32 %v1205, 0.001
    %v1208 = vadd.f32 %v1206, 0.001
    %v1209 = vrsqrt.pop %v1207
    %v1210 = vrsqrt.pop %v1208
    %v1211 = vmul.f32 %v58, %v1209
    %v1212 = vmul.f32 %v59, %v1210
    %v1213 = vmul.f32 %v1197, %v1211
    %v1214 = vmul.f32 %v1198, %v1212
    %1217 = vrot.lane.b32.xlu0 %v1213, 1
    %v1218 = vpop.permute.xlu0 %1217
    %1219 = vrot.lane.b32.xlu0 %v1214, 1
    %v1220 = vpop.permute.xlu0 %1219
    %v1223 = vsub.f32 %v58, %v1218
    %v1224 = vsub.f32 %v59, %v1220
    %v1225 = vmul.f32 %v1211, %v1188
    %v1226 = vmul.f32 %v1212, %v1190
    %v1227 = vmul.f32 %v1223, 128.0
    %v1228 = vmul.f32 %v1224, 128.0
    %1231 = vrot.lane.b32.xlu0 %v1227, 127
    %v1232 = vpop.permute.xlu0 %1231
    %1233 = vrot.lane.b32.xlu0 %v1228, 127
    %v1234 = vpop.permute.xlu0 %1233
    %v1237 = vadd.f32 %v1225, %v1232
    %v1238 = vadd.f32 %v1226, %v1234
    %v1239 = vmul.f32 %v1211, %v1211
    %v1240 = vmul.f32 %v1212, %v1212
    %v1241 = vmul.f32 %v1239, %v1194
    %v1242 = vmul.f32 %v1240, %v1196
    %v1243 = vmul.f32 %v1211, 2.0
    %v1244 = vmul.f32 %v1212, 2.0
    %1247 = vrot.lane.b32.xlu0 %v1223, 127
    %v1248 = vpop.permute.xlu0 %1247
    %1249 = vrot.lane.b32.xlu0 %v1224, 127
    %v1250 = vpop.permute.xlu0 %1249
    %v1253 = vmul.f32 %v1243, %v1248
    %v1254 = vmul.f32 %v1244, %v1250
    %v1255 = vmul.f32 %v1253, %v1188
    %v1256 = vmul.f32 %v1254, %v1190
    %v1257 = vadd.f32 %v1241, %v1255
    %v1258 = vadd.f32 %v1242, %v1256
    %v1259 = vmul.f32 %v1227, %v1223
    %v1260 = vmul.f32 %v1228, %v1224
    %1263 = vrot.lane.b32.xlu0 %v1259, 127
    %v1264 = vpop.permute.xlu0 %1263
    %1265 = vrot.lane.b32.xlu0 %v1260, 127
    %v1266 = vpop.permute.xlu0 %1265
    %v1269 = vadd.f32 %v1257, %v1264
    %v1270 = vadd.f32 %v1258, %v1266
    %v1271 = vmul.f32 %v1237, %v144
    %v1272 = vmul.f32 %v1238, %v144
    %v1273 = vmul.f32 %v1269, %v144
    %v1274 = vmul.f32 %v1270, %v144
    %v1275 = vmul.f32 %v1271, %v1271
    %v1276 = vmul.f32 %v1272, %v1272
    %v1277 = vsub.f32 %v1273, %v1275
    %v1278 = vsub.f32 %v1274, %v1276
    %v1279 = vmax.f32 %v1277, 0.0
    %v1280 = vmax.f32 %v1278, 0.0
    %v1281 = vadd.f32 %v1279, 1e-05
    %v1282 = vadd.f32 %v1280, 1e-05
    %v1283 = vrsqrt.pop %v1281
    %v1284 = vrsqrt.pop %v1282
    %1287 = vrot.lane.b32.xlu0 %v1283, 2
    %v1288 = vpop.permute.xlu0 %1287
    %1289 = vrot.lane.b32.xlu0 %v1284, 2
    %v1290 = vpop.permute.xlu0 %1289
    %v1293 = vmul.f32 %v58, %v1288
    %v1294 = vmul.f32 %v59, %v1290
    %1297 = vrot.lane.b32.xlu0 %v1293, 126
    %v1298 = vpop.permute.xlu0 %1297
    %1299 = vrot.lane.b32.xlu0 %v1294, 126
    %v1300 = vpop.permute.xlu0 %1299
    %v1303 = vmul.f32 %v1271, %v1298
    %v1304 = vmul.f32 %v1272, %v1300
    %1307 = vrot.lane.b32.xlu0 %v1303, 3
    %v1308 = vpop.permute.xlu0 %1307
    %1309 = vrot.lane.b32.xlu0 %v1304, 3
    %v1310 = vpop.permute.xlu0 %1309
    %v1313 = vsub.f32 %v58, %v1308
    %v1314 = vsub.f32 %v59, %v1310
    %v1315 = vmul.f32 %v1211, %v1298
    %v1316 = vmul.f32 %v1212, %v1300
    %1318 = vset.pattern.permute.xlu0 17
    %1319 = vperm.xlu0 %1318, %v1315
    %v1320 = vpop.permute.xlu0 %1319
    %1323 = vset.pattern.permute.xlu0 17
    %1324 = vperm.xlu0 %1323, %v1316
    %v1325 = vpop.permute.xlu0 %1324
    %v1327 = vmul.f32 %v1179, %v1320
    %v1328 = vmul.f32 %v1184, %v1325
    %1329 = vrot.lane.b32.xlu0 %v1293, 127
    %v1330 = vpop.permute.xlu0 %1329
    %1331 = vrot.lane.b32.xlu0 %v1294, 127
    %v1332 = vpop.permute.xlu0 %1331
    %v1335 = vmul.f32 %v1223, %v1330
    %v1336 = vmul.f32 %v1224, %v1332
    %1339 = vrot.lane.b32.xlu0 %v1313, 126
    %v1340 = vpop.permute.xlu0 %1339
    %1341 = vrot.lane.b32.xlu0 %v1314, 126
    %v1342 = vpop.permute.xlu0 %1341
    %v1345 = vadd.f32 %v1335, %v1340
    %v1346 = vadd.f32 %v1336, %v1342
    %1348 = vset.pattern.permute.xlu0 18
    %1349 = vperm.xlu0 %1348, %v1345
    %v1350 = vpop.permute.xlu0 %1349
    %1353 = vset.pattern.permute.xlu0 18
    %1354 = vperm.xlu0 %1353, %v1346
    %v1355 = vpop.permute.xlu0 %1354
    %v1357 = vadd.f32 %v1327, %v1350
    %v1358 = vadd.f32 %v1328, %v1355
    %v1359 = vmax.f32 %v1357, 0.0
    %v1360 = vmax.f32 %v1358, 0.0
    %s1361 = scalar_lea.vmem [#allocation7], 80
    %v1362 = vld [vmem:[%s1361] sm:$0xff]
    %v1363 = vld [vmem:[%s1361 + $0x8] sm:$0xff]
    %v1365 = vsel %vm237, %v1362, 0
    %v1368 = vsel %vm237, %v1363, 0
    %1370 = vmatprep.subr.mxu0 0.0
    %1371 = vmatpush1.msra.mxu0 %v1359
    %1372 = vmatprep.subr.mxu0 0.0
    %1373 = vmatpush1.msra.mxu0 %v1360
    %1374 = vmatprep.subr.mxu0 0.0
    %1375 = vmatpush1.msra.mxu0 0.0
    %1376 = vmatprep.subr.mxu0 0.0
    %1377 = vmatpush1.msra.mxu0 0.0
    %1378 = vmatprep.subr.mxu0 0.0
    %1379 = vmatpush1.msra.mxu0 0.0
    %1380 = vmatprep.subr.mxu0 0.0
    %1381 = vmatpush1.msra.mxu0 0.0
    %1382 = vmatprep.subr.mxu0 0.0
    %1383 = vmatpush1.msra.mxu0 0.0
    %1384 = vmatprep.subr.mxu0 0.0
    %1385 = vmatpush1.msra.mxu0 0.0
    %1386 = vmatprep.subr.mxu0 0.0
    %1387 = vmatpush1.msra.mxu0 0.0
    %1388 = vmatprep.subr.mxu0 0.0
    %1389 = vmatpush1.msra.mxu0 0.0
    %1390 = vmatprep.subr.mxu0 0.0
    %1391 = vmatpush1.msra.mxu0 0.0
    %1392 = vmatprep.subr.mxu0 0.0
    %1393 = vmatpush1.msra.mxu0 0.0
    %1394 = vmatprep.subr.mxu0 0.0
    %1395 = vmatpush1.msra.mxu0 0.0
    %1396 = vmatprep.subr.mxu0 0.0
    %1397 = vmatpush1.msra.mxu0 0.0
    %1398 = vmatprep.subr.mxu0 0.0
    %1399 = vmatpush1.msra.mxu0 0.0
    %1400 = vmatprep.subr.mxu0 0.0
    %1401 = vmatpush1.msra.mxu0 0.0
    %1402 = vmatprep.subr.mxu0 0.0
    %1403 = vmatpush1.msra.mxu0 0.0
    %1404 = vmatprep.subr.mxu0 0.0
    %1405 = vmatpush1.msra.mxu0 0.0
    %1406 = vmatprep.subr.mxu0 0.0
    %1407 = vmatpush1.msra.mxu0 0.0
    %1408 = vmatprep.subr.mxu0 0.0
    %1409 = vmatpush1.msra.mxu0 0.0
    %1410 = vmatprep.subr.mxu0 0.0
    %1411 = vmatpush1.msra.mxu0 0.0
    %1412 = vmatprep.subr.mxu0 0.0
    %1413 = vmatpush1.msra.mxu0 0.0
    %1414 = vmatprep.subr.mxu0 0.0
    %1415 = vmatpush1.msra.mxu0 0.0
    %1416 = vmatprep.subr.mxu0 0.0
    %1417 = vmatpush1.msra.mxu0 0.0
    %1418 = vmatprep.subr.mxu0 0.0
    %1419 = vmatpush1.msra.mxu0 0.0
    %1420 = vmatprep.subr.mxu0 0.0
    %1421 = vmatpush1.msra.mxu0 0.0
    %1422 = vmatprep.subr.mxu0 0.0
    %1423 = vmatpush1.msra.mxu0 0.0
    %1424 = vmatprep.subr.mxu0 0.0
    %1425 = vmatpush1.msra.mxu0 0.0
    %1426 = vmatprep.subr.mxu0 0.0
    %1427 = vmatpush1.msra.mxu0 0.0
    %1428 = vmatprep.subr.mxu0 0.0
    %1429 = vmatpush1.msra.mxu0 0.0
    %1430 = vmatprep.subr.mxu0 0.0
    %1431 = vmatpush1.msra.mxu0 0.0
    %1432 = vmatprep.subr.mxu0 0.0
    %1433 = vmatpush1.msra.mxu0 0.0
    %1434 = vmatprep.mubr.f32.mxu0 0.0
    %1435 = vmatmul.mubr.f32.gmra.mrb[0].mxu0 %v1365
    %v1436 = vpop.f32.mrb[0].mxu0
    %v1437 = vadd.f32 0.0, %v1436
    %v1438 = vpop.f32.mrb[0].mxu0
    %1439 = vmatprep.mubr.f32.mxu0 0.0
    %1440 = vmatmul.mubr.f32.gmra.mrb[0].mxu0 %v1368
    %v1441 = vpop.f32.mrb[0].mxu0
    %v1442 = vadd.f32 0.0, %v1441
    %v1443 = vpop.f32.mrb[0].mxu0
    %1444 = vdwg.mxu0
    %1445 = vadd.xlane.f32.xlu0 %v1437
    %v1446 = vpop.xlane.xlu0 %1445
    %1447 = vadd.xlane.f32.xlu0 %v1442
    %v1448 = vpop.xlane.xlu0 %1447
    %v1449 = vmul.f32 %v1437, %v1437
    %v1450 = vmul.f32 %v1442, %v1442
    %1451 = vadd.xlane.f32.xlu0 %v1449
    %v1452 = vpop.xlane.xlu0 %1451
    %1453 = vadd.xlane.f32.xlu0 %v1450
    %v1454 = vpop.xlane.xlu0 %1453
    %v1455 = vmul.f32 %v1446, 0.0078125
    %v1456 = vmul.f32 %v1448, 0.0078125
    %v1457 = vmul.f32 %v1452, 0.0078125
    %v1458 = vmul.f32 %v1454, 0.0078125
    %v1459 = vmul.f32 %v1455, %v1455
    %v1460 = vmul.f32 %v1456, %v1456
    %v1461 = vsub.f32 %v1457, %v1459
    %v1462 = vsub.f32 %v1458, %v1460
    %v1463 = vmax.f32 %v1461, 0.0
    %v1464 = vmax.f32 %v1462, 0.0
    %v1465 = vadd.f32 %v1463, 0.001
    %v1466 = vadd.f32 %v1464, 0.001
    %v1467 = vrsqrt.pop %v1465
    %v1468 = vrsqrt.pop %v1466
    %v1469 = vmul.f32 %v58, %v1467
    %v1470 = vmul.f32 %v59, %v1468
    %v1471 = vmul.f32 %v1455, %v1469
    %v1472 = vmul.f32 %v1456, %v1470
    %1475 = vrot.lane.b32.xlu0 %v1471, 1
    %v1476 = vpop.permute.xlu0 %1475
    %1477 = vrot.lane.b32.xlu0 %v1472, 1
    %v1478 = vpop.permute.xlu0 %1477
    %v1481 = vsub.f32 %v58, %v1476
    %v1482 = vsub.f32 %v59, %v1478
    %v1483 = vmul.f32 %v1469, %v1446
    %v1484 = vmul.f32 %v1470, %v1448
    %v1485 = vmul.f32 %v1481, 128.0
    %v1486 = vmul.f32 %v1482, 128.0
    %1489 = vrot.lane.b32.xlu0 %v1485, 127
    %v1490 = vpop.permute.xlu0 %1489
    %1491 = vrot.lane.b32.xlu0 %v1486, 127
    %v1492 = vpop.permute.xlu0 %1491
    %v1495 = vadd.f32 %v1483, %v1490
    %v1496 = vadd.f32 %v1484, %v1492
    %v1497 = vmul.f32 %v1469, %v1469
    %v1498 = vmul.f32 %v1470, %v1470
    %v1499 = vmul.f32 %v1497, %v1452
    %v1500 = vmul.f32 %v1498, %v1454
    %v1501 = vmul.f32 %v1469, 2.0
    %v1502 = vmul.f32 %v1470, 2.0
    %1505 = vrot.lane.b32.xlu0 %v1481, 127
    %v1506 = vpop.permute.xlu0 %1505
    %1507 = vrot.lane.b32.xlu0 %v1482, 127
    %v1508 = vpop.permute.xlu0 %1507
    %v1511 = vmul.f32 %v1501, %v1506
    %v1512 = vmul.f32 %v1502, %v1508
    %v1513 = vmul.f32 %v1511, %v1446
    %v1514 = vmul.f32 %v1512, %v1448
    %v1515 = vadd.f32 %v1499, %v1513
    %v1516 = vadd.f32 %v1500, %v1514
    %v1517 = vmul.f32 %v1485, %v1481
    %v1518 = vmul.f32 %v1486, %v1482
    %1521 = vrot.lane.b32.xlu0 %v1517, 127
    %v1522 = vpop.permute.xlu0 %1521
    %1523 = vrot.lane.b32.xlu0 %v1518, 127
    %v1524 = vpop.permute.xlu0 %1523
    %v1527 = vadd.f32 %v1515, %v1522
    %v1528 = vadd.f32 %v1516, %v1524
    %v1529 = vmul.f32 %v1495, %v144
    %v1530 = vmul.f32 %v1496, %v144
    %v1531 = vmul.f32 %v1527, %v144
    %v1532 = vmul.f32 %v1528, %v144
    %v1533 = vmul.f32 %v1529, %v1529
    %v1534 = vmul.f32 %v1530, %v1530
    %v1535 = vsub.f32 %v1531, %v1533
    %v1536 = vsub.f32 %v1532, %v1534
    %v1537 = vmax.f32 %v1535, 0.0
    %v1538 = vmax.f32 %v1536, 0.0
    %v1539 = vadd.f32 %v1537, 1e-05
    %v1540 = vadd.f32 %v1538, 1e-05
    %v1541 = vrsqrt.pop %v1539
    %v1542 = vrsqrt.pop %v1540
    %1545 = vrot.lane.b32.xlu0 %v1541, 2
    %v1546 = vpop.permute.xlu0 %1545
    %1547 = vrot.lane.b32.xlu0 %v1542, 2
    %v1548 = vpop.permute.xlu0 %1547
    %v1551 = vmul.f32 %v58, %v1546
    %v1552 = vmul.f32 %v59, %v1548
    %1555 = vrot.lane.b32.xlu0 %v1551, 126
    %v1556 = vpop.permute.xlu0 %1555
    %1557 = vrot.lane.b32.xlu0 %v1552, 126
    %v1558 = vpop.permute.xlu0 %1557
    %v1561 = vmul.f32 %v1529, %v1556
    %v1562 = vmul.f32 %v1530, %v1558
    %1565 = vrot.lane.b32.xlu0 %v1561, 3
    %v1566 = vpop.permute.xlu0 %1565
    %1567 = vrot.lane.b32.xlu0 %v1562, 3
    %v1568 = vpop.permute.xlu0 %1567
    %v1571 = vsub.f32 %v58, %v1566
    %v1572 = vsub.f32 %v59, %v1568
    %v1573 = vmul.f32 %v1469, %v1556
    %v1574 = vmul.f32 %v1470, %v1558
    %1576 = vset.pattern.permute.xlu0 21
    %1577 = vperm.xlu0 %1576, %v1573
    %v1578 = vpop.permute.xlu0 %1577
    %1581 = vset.pattern.permute.xlu0 21
    %1582 = vperm.xlu0 %1581, %v1574
    %v1583 = vpop.permute.xlu0 %1582
    %v1585 = vmul.f32 %v1437, %v1578
    %v1586 = vmul.f32 %v1442, %v1583
    %1587 = vrot.lane.b32.xlu0 %v1551, 127
    %v1588 = vpop.permute.xlu0 %1587
    %1589 = vrot.lane.b32.xlu0 %v1552, 127
    %v1590 = vpop.permute.xlu0 %1589
    %v1593 = vmul.f32 %v1481, %v1588
    %v1594 = vmul.f32 %v1482, %v1590
    %1597 = vrot.lane.b32.xlu0 %v1571, 126
    %v1598 = vpop.permute.xlu0 %1597
    %1599 = vrot.lane.b32.xlu0 %v1572, 126
    %v1600 = vpop.permute.xlu0 %1599
    %v1603 = vadd.f32 %v1593, %v1598
    %v1604 = vadd.f32 %v1594, %v1600
    %1606 = vset.pattern.permute.xlu0 22
    %1607 = vperm.xlu0 %1606, %v1603
    %v1608 = vpop.permute.xlu0 %1607
    %1611 = vset.pattern.permute.xlu0 22
    %1612 = vperm.xlu0 %1611, %v1604
    %v1613 = vpop.permute.xlu0 %1612
    %v1615 = vadd.f32 %v1585, %v1608
    %v1616 = vadd.f32 %v1586, %v1613
    %s1617 = scalar_lea.vmem [#allocation7], 96
    %v1618 = vld [vmem:[%s1617] sm:$0xff]
    %v1619 = vld [vmem:[%s1617 + $0x8] sm:$0xff]
    %s1620 = scalar_lea.vmem [#allocation7], 112
    %v1621 = vld [vmem:[%s1620] sm:$0xff]
    %v1622 = vld [vmem:[%s1620 + $0x8] sm:$0xff]
    %v1624 = vsel %vm237, %v1621, 0
    %v1627 = vsel %vm237, %v1622, 0
    %1629 = vmatprep.subr.mxu0 0.0
    %1630 = vmatpush1.msra.mxu0 %v927
    %1631 = vmatprep.subr.mxu0 0.0
    %1632 = vmatpush1.msra.mxu0 %v928
    %1633 = vmatprep.subr.mxu0 0.0
    %1634 = vmatpush1.msra.mxu0 0.0
    %1635 = vmatprep.subr.mxu0 0.0
    %1636 = vmatpush1.msra.mxu0 0.0
    %1637 = vmatprep.subr.mxu0 0.0
    %1638 = vmatpush1.msra.mxu0 0.0
    %1639 = vmatprep.subr.mxu0 0.0
    %1640 = vmatpush1.msra.mxu0 0.0
    %1641 = vmatprep.subr.mxu0 0.0
    %1642 = vmatpush1.msra.mxu0 0.0
    %1643 = vmatprep.subr.mxu0 0.0
    %1644 = vmatpush1.msra.mxu0 0.0
    %1645 = vmatprep.subr.mxu0 0.0
    %1646 = vmatpush1.msra.mxu0 0.0
    %1647 = vmatprep.subr.mxu0 0.0
    %1648 = vmatpush1.msra.mxu0 0.0
    %1649 = vmatprep.subr.mxu0 0.0
    %1650 = vmatpush1.msra.mxu0 0.0
    %1651 = vmatprep.subr.mxu0 0.0
    %1652 = vmatpush1.msra.mxu0 0.0
    %1653 = vmatprep.subr.mxu0 0.0
    %1654 = vmatpush1.msra.mxu0 0.0
    %1655 = vmatprep.subr.mxu0 0.0
    %1656 = vmatpush1.msra.mxu0 0.0
    %1657 = vmatprep.subr.mxu0 0.0
    %1658 = vmatpush1.msra.mxu0 0.0
    %1659 = vmatprep.subr.mxu0 0.0
    %1660 = vmatpush1.msra.mxu0 0.0
    %1661 = vmatprep.subr.mxu0 0.0
    %1662 = vmatpush1.msra.mxu0 0.0
    %1663 = vmatprep.subr.mxu0 0.0
    %1664 = vmatpush1.msra.mxu0 0.0
    %1665 = vmatprep.subr.mxu0 0.0
    %1666 = vmatpush1.msra.mxu0 0.0
    %1667 = vmatprep.subr.mxu0 0.0
    %1668 = vmatpush1.msra.mxu0 0.0
    %1669 = vmatprep.subr.mxu0 0.0
    %1670 = vmatpush1.msra.mxu0 0.0
    %1671 = vmatprep.subr.mxu0 0.0
    %1672 = vmatpush1.msra.mxu0 0.0
    %1673 = vmatprep.subr.mxu0 0.0
    %1674 = vmatpush1.msra.mxu0 0.0
    %1675 = vmatprep.subr.mxu0 0.0
    %1676 = vmatpush1.msra.mxu0 0.0
    %1677 = vmatprep.subr.mxu0 0.0
    %1678 = vmatpush1.msra.mxu0 0.0
    %1679 = vmatprep.subr.mxu0 0.0
    %1680 = vmatpush1.msra.mxu0 0.0
    %1681 = vmatprep.subr.mxu0 0.0
    %1682 = vmatpush1.msra.mxu0 0.0
    %1683 = vmatprep.subr.mxu0 0.0
    %1684 = vmatpush1.msra.mxu0 0.0
    %1685 = vmatprep.subr.mxu0 0.0
    %1686 = vmatpush1.msra.mxu0 0.0
    %1687 = vmatprep.subr.mxu0 0.0
    %1688 = vmatpush1.msra.mxu0 0.0
    %1689 = vmatprep.subr.mxu0 0.0
    %1690 = vmatpush1.msra.mxu0 0.0
    %1691 = vmatprep.subr.mxu0 0.0
    %1692 = vmatpush1.msra.mxu0 0.0
    %1693 = vmatprep.mubr.f32.mxu0 0.0
    %1694 = vmatmul.mubr.f32.gmra.mrb[0].mxu0 %v1624
    %v1695 = vpop.f32.mrb[0].mxu0
    %v1696 = vadd.f32 0.0, %v1695
    %v1697 = vpop.f32.mrb[0].mxu0
    %1698 = vmatprep.mubr.f32.mxu0 0.0
    %1699 = vmatmul.mubr.f32.gmra.mrb[0].mxu0 %v1627
    %v1700 = vpop.f32.mrb[0].mxu0
    %v1701 = vadd.f32 0.0, %v1700
    %v1702 = vpop.f32.mrb[0].mxu0
    %1703 = vdwg.mxu0
    %v1705 = vsel %vm237, %v1618, 0
    %v1708 = vsel %vm237, %v1619, 0
    %1710 = vmatprep.subr.mxu0 0.0
    %1711 = vmatpush1.msra.mxu0 %v1615
    %1712 = vmatprep.subr.mxu0 0.0
    %1713 = vmatpush1.msra.mxu0 %v1616
    %1714 = vmatprep.subr.mxu0 0.0
    %1715 = vmatpush1.msra.mxu0 0.0
    %1716 = vmatprep.subr.mxu0 0.0
    %1717 = vmatpush1.msra.mxu0 0.0
    %1718 = vmatprep.subr.mxu0 0.0
    %1719 = vmatpush1.msra.mxu0 0.0
    %1720 = vmatprep.subr.mxu0 0.0
    %1721 = vmatpush1.msra.mxu0 0.0
    %1722 = vmatprep.subr.mxu0 0.0
    %1723 = vmatpush1.msra.mxu0 0.0
    %1724 = vmatprep.subr.mxu0 0.0
    %1725 = vmatpush1.msra.mxu0 0.0
    %1726 = vmatprep.subr.mxu0 0.0
    %1727 = vmatpush1.msra.mxu0 0.0
    %1728 = vmatprep.subr.mxu0 0.0
    %1729 = vmatpush1.msra.mxu0 0.0
    %1730 = vmatprep.subr.mxu0 0.0
    %1731 = vmatpush1.msra.mxu0 0.0
    %1732 = vmatprep.subr.mxu0 0.0
    %1733 = vmatpush1.msra.mxu0 0.0
    %1734 = vmatprep.subr.mxu0 0.0
    %1735 = vmatpush1.msra.mxu0 0.0
    %1736 = vmatprep.subr.mxu0 0.0
    %1737 = vmatpush1.msra.mxu0 0.0
    %1738 = vmatprep.subr.mxu0 0.0
    %1739 = vmatpush1.msra.mxu0 0.0
    %1740 = vmatprep.subr.mxu0 0.0
    %1741 = vmatpush1.msra.mxu0 0.0
    %1742 = vmatprep.subr.mxu0 0.0
    %1743 = vmatpush1.msra.mxu0 0.0
    %1744 = vmatprep.subr.mxu0 0.0
    %1745 = vmatpush1.msra.mxu0 0.0
    %1746 = vmatprep.subr.mxu0 0.0
    %1747 = vmatpush1.msra.mxu0 0.0
    %1748 = vmatprep.subr.mxu0 0.0
    %1749 = vmatpush1.msra.mxu0 0.0
    %1750 = vmatprep.subr.mxu0 0.0
    %1751 = vmatpush1.msra.mxu0 0.0
    %1752 = vmatprep.subr.mxu0 0.0
    %1753 = vmatpush1.msra.mxu0 0.0
    %1754 = vmatprep.subr.mxu0 0.0
    %1755 = vmatpush1.msra.mxu0 0.0
    %1756 = vmatprep.subr.mxu0 0.0
    %1757 = vmatpush1.msra.mxu0 0.0
    %1758 = vmatprep.subr.mxu0 0.0
    %1759 = vmatpush1.msra.mxu0 0.0
    %1760 = vmatprep.subr.mxu0 0.0
    %1761 = vmatpush1.msra.mxu0 0.0
    %1762 = vmatprep.subr.mxu0 0.0
    %1763 = vmatpush1.msra.mxu0 0.0
    %1764 = vmatprep.subr.mxu0 0.0
    %1765 = vmatpush1.msra.mxu0 0.0
    %1766 = vmatprep.subr.mxu0 0.0
    %1767 = vmatpush1.msra.mxu0 0.0
    %1768 = vmatprep.subr.mxu0 0.0
    %1769 = vmatpush1.msra.mxu0 0.0
    %1770 = vmatprep.subr.mxu0 0.0
    %1771 = vmatpush1.msra.mxu0 0.0
    %1772 = vmatprep.subr.mxu0 0.0
    %1773 = vmatpush1.msra.mxu0 0.0
    %1774 = vmatprep.mubr.f32.mxu0 0.0
    %1775 = vmatmul.mubr.f32.gmra.mrb[0].mxu0 %v1705
    %v1776 = vpop.f32.mrb[0].mxu0
    %v1777 = vadd.f32 %v1696, %v1776
    %v1778 = vpop.f32.mrb[0].mxu0
    %1779 = vmatprep.mubr.f32.mxu0 0.0
    %1780 = vmatmul.mubr.f32.gmra.mrb[0].mxu0 %v1708
    %v1781 = vpop.f32.mrb[0].mxu0
    %v1782 = vadd.f32 %v1701, %v1781
    %v1783 = vpop.f32.mrb[0].mxu0
    %1784 = vdwg.mxu0
    %1785 = vset.pattern.permute.xlu0 25
    %1786 = vperm.xlu0 %1785, %v58
    %v1787 = vpop.permute.xlu0 %1786
    %1789 = vset.pattern.permute.xlu0 25
    %1790 = vperm.xlu0 %1789, %v59
    %v1791 = vpop.permute.xlu0 %1790
    %v1793 = vadd.f32 %v1777, %v1787
    %v1794 = vadd.f32 %v1782, %v1791
    %1795 = vst [vmem:[#allocation8] sm:$0xff] %v1793
    %1796 = vst [vmem:[#allocation8 + $0x8] sm:$0xff] %v1794
    // Predicated region
    $region26: #{tpu_custom_call.1} parent=1 // pred_check
      _
    $region27: #{tpu_custom_call.1} parent=1 // pred_check_branch
      %1798 = sbr.rel (0) target = $region29
    $region28: #{tpu_custom_call.1} parent=1 // pred_region
      %s1800 = ssub.s32 256, 256
      %1801 = vsyncadd [#allocation4], %s1800
      %s1802 = sshll.u32 [#allocation8], 4
      %s1803 = int_to_ptr.vmem [resolvable:$true] %s1802
      %1808 = dma.vmem_to_hbm [thread:$0]  %s1803, 256, %s3, [#allocation4], 128, 128, 8
    $region29: #{tpu_custom_call.1} parent=1 // pred_fallthru
      _
    // Predicated region
    $region30: #{tpu_custom_call.1} parent=1 // pred_check
      _
    $region31: #{tpu_custom_call.1} parent=1 // pred_check_branch
      %1810 = sbr.rel (0) target = $region33
    $region32: #{tpu_custom_call.1} parent=1 // pred_region
      %1811 = dma.done [#allocation4], 256
    $region33: #{tpu_custom_call.1} parent=1 // pred_fallthru
      _
    %1812 = vsyncpa [#allocation3], 1
    %1813 = vsyncpa [#allocation6], 1
    %1814 = vsyncpa [#allocation4], 1

</llo_original>
